<compile_context>
chip_gen: v6e
topology: v6e:2x2x1
jax: 0.10.0
libtpu: 0.0.40
codegen_flags: <defaults>
</compile_context>

<pallas_src>
import functools
import math

import jax
import jax.numpy as jnp
from jax.experimental import pallas as pl
from jax.experimental.pallas import tpu as pltpu


def _round_up(n, m):
    return -(-n // m) * m


# --------------------------------------------------------------------------
# Kernel A: fused QKV projection + interleaved RoPE on q, k
# --------------------------------------------------------------------------

def _qkv_rope_kernel(x_ref, w_ref, b_ref, cos_ref, sin_ref,
                     q_ref, k_ref, v_ref, *, inner, rot_dim):
    # One lane-dense (tm, 3*inner) matmul, f32 accumulation, weights in native dtype.
    qkv = jnp.dot(x_ref[...], w_ref[...], preferred_element_type=jnp.float32)
    qkv = qkv + b_ref[...].astype(jnp.float32)

    q = qkv[:, :inner]
    k = qkv[:, inner:2 * inner]
    v = qkv[:, 2 * inner:]

    cos = cos_ref[...].astype(jnp.float32)
    sin = sin_ref[...].astype(jnp.float32)

    tm = x_ref.shape[0]
    lane = jax.lax.broadcasted_iota(jnp.int32, (tm, rot_dim), 1)
    is_even = (lane % 2) == 0

    def rope(t):
        tr = t[:, :rot_dim]
        # rotate_every_two: out[2i] = -x[2i+1], out[2i+1] = x[2i]
        # (circular wrap elements of the rolls are never selected)
        right = jnp.roll(tr, -1, axis=1)   # x[j+1]
        left = jnp.roll(tr, 1, axis=1)     # x[j-1]
        rot = jnp.where(is_even, -right, left)
        return tr * cos + rot * sin

    q_ref[:, :rot_dim] = rope(q).astype(q_ref.dtype)
    k_ref[:, :rot_dim] = rope(k).astype(k_ref.dtype)
    if rot_dim < inner:
        q_ref[:, rot_dim:] = q[:, rot_dim:].astype(q_ref.dtype)
        k_ref[:, rot_dim:] = k[:, rot_dim:].astype(k_ref.dtype)
    v_ref[...] = v.astype(v_ref.dtype)


# --------------------------------------------------------------------------
# Kernel B: flash-style, length-masked attention, all heads per step,
#           (B, N, inner) layout (no head transposes anywhere)
# --------------------------------------------------------------------------

def _flash_attention_kernel(lens_ref, q_ref, k_ref, v_ref, o_ref,
                            m_scr, l_scr, acc_scr,
                            *, heads, dim_head, tkv, scale):
    b = pl.program_id(0)
    kv = pl.program_id(2)
    length = lens_ref[b]                                   # scalar from SMEM

    @pl.when(kv == 0)
    def _init():
        m_scr[...] = jnp.full(m_scr.shape, -jnp.inf, jnp.float32)
        l_scr[...] = jnp.zeros(l_scr.shape, jnp.float32)
        acc_scr[...] = jnp.zeros(acc_scr.shape, jnp.float32)

    kv_start = kv * tkv

    @pl.when(kv_start < length)                            # skip fully-masked kv tiles
    def _compute():
        q = q_ref[...].astype(jnp.float32) * scale         # (tq, inner)
        k = k_ref[...].astype(jnp.float32)                 # (tkv, inner)
        v = v_ref[...].astype(jnp.float32)                 # (tkv, inner)
        tq = q.shape[0]

        kpos = kv_start + jax.lax.broadcasted_iota(jnp.int32, (tq, tkv), 1)
        key_valid = kpos < length                          # (tq, tkv) key mask
        # zero V rows at/after `length` (also covers garbage rows of a partial
        # trailing kv block) so zero-weight garbage cannot poison p @ V
        vrow = kv_start + jax.lax.broadcasted_iota(jnp.int32, (tkv, 1), 0)
        v = jnp.where(vrow < length, v, 0.0)

        for h in range(heads):                             # static unroll
            sl = slice(h * dim_head, (h + 1) * dim_head)
            qh, kh, vh = q[:, sl], k[:, sl], v[:, sl]
            s = jax.lax.dot_general(qh, kh, (((1,), (1,)), ((), ())),
                                    preferred_element_type=jnp.float32)  # (tq, tkv)
            s = jnp.where(key_valid, s, -1e30)

            m_prev = m_scr[h]                               # (tq, 1)
            m_new = jnp.maximum(m_prev, jnp.max(s, axis=-1, keepdims=True))
            alpha = jnp.exp(m_prev - m_new)
            p = jnp.exp(s - m_new)
            l_scr[h] = alpha * l_scr[h] + jnp.sum(p, axis=-1, keepdims=True)
            acc_scr[h] = alpha * acc_scr[h] + jnp.dot(
                p, vh, preferred_element_type=jnp.float32)
            m_scr[h] = m_new

    @pl.when(kv == pl.num_programs(2) - 1)
    def _finalize():
        outs = []
        for h in range(heads):
            l = l_scr[h]
            # length == 0 rows accumulated nothing; keep them finite (they are
            # zeroed anyway by the query-length mask after the output projection)
            l_safe = jnp.where(l > 0.0, l, 1.0)
            outs.append(acc_scr[h] * pl.reciprocal(l_safe, approx=True))
        o_ref[...] = jnp.concatenate(outs, axis=-1).astype(o_ref.dtype)


# --------------------------------------------------------------------------
# Kernel C: output projection + query-length mask
# --------------------------------------------------------------------------

def _out_proj_kernel(ctx_ref, w_ref, b_ref, mask_ref, o_ref):
    y = jnp.dot(ctx_ref[...], w_ref[...], preferred_element_type=jnp.float32)
    y = y + b_ref[...].astype(jnp.float32)
    o_ref[...] = (y * mask_ref[...].astype(jnp.float32)).astype(o_ref.dtype)


# --------------------------------------------------------------------------
# Wrapper
# --------------------------------------------------------------------------

@functools.partial(jax.jit, static_argnames=("heads", "dim_head"))
def attention_forward(x, rope_cos, rope_sin, input_lengths,
                      wq, bq, wk, bk, wv, bv, wo, bo, *, heads, dim_head):
    """F5-TTS Attention forward (self-attention, padded path).

    x:             (B, N, dim)
    rope_cos/sin:  (B, N, rot_dim)  (rot_dim even, <= heads*dim_head)
    input_lengths: (B,) int32
    wq/wk/wv:      (dim, inner), bq/bk/bv: (inner,)   [PyTorch weight transposed]
    wo:            (inner, dim),  bo: (dim,)
    """
    B, N, dim = x.shape
    inner = heads * dim_head
    rot_dim = rope_cos.shape[-1]
    assert rot_dim % 2 == 0 and 2 <= rot_dim <= inner

    M = B * N
    tm = min(_round_up(M, 8), 256)

    x2 = x.reshape(M, dim)
    cos2 = rope_cos.reshape(M, rot_dim)
    sin2 = rope_sin.reshape(M, rot_dim)

    # fuse QKV weights (lane-dense (dim, 3*inner) matmul)
    w_qkv = jnp.concatenate([wq, wk, wv], axis=1)
    b_qkv = jnp.concatenate([bq, bk, bv]).reshape(1, 3 * inner)

    proj_params = pltpu.CompilerParams(
        dimension_semantics=("parallel",),
        vmem_limit_bytes=48 * 1024 * 1024)

    q2, k2, v2 = pl.pallas_call(
        functools.partial(_qkv_rope_kernel, inner=inner, rot_dim=rot_dim),
        out_shape=(jax.ShapeDtypeStruct((M, inner), x.dtype),) * 3,
        grid_spec=pltpu.PrefetchScalarGridSpec(
            num_scalar_prefetch=0,
            grid=(pl.cdiv(M, tm),),
            in_specs=[
                pl.BlockSpec((tm, dim), lambda i: (i, 0)),              # x tile
                pl.BlockSpec((dim, 3 * inner), lambda i: (0, 0)),       # W_qkv (resident)
                pl.BlockSpec((1, 3 * inner), lambda i: (0, 0)),         # b_qkv
                pl.BlockSpec((tm, rot_dim), lambda i: (i, 0)),          # cos tile
                pl.BlockSpec((tm, rot_dim), lambda i: (i, 0)),          # sin tile
            ],
            out_specs=[
                pl.BlockSpec((tm, inner), lambda i: (i, 0)),
                pl.BlockSpec((tm, inner), lambda i: (i, 0)),
                pl.BlockSpec((tm, inner), lambda i: (i, 0)),
            ],
        ),
        compiler_params=proj_params,
    )(x2, w_qkv, b_qkv, cos2, sin2)

    # (M, inner) -> (B, N, inner): pure reshapes, no head transposes / HBM shuffles.
    q3 = q2.reshape(B, N, inner)
    k3 = k2.reshape(B, N, inner)
    v3 = v2.reshape(B, N, inner)

    tq = min(_round_up(N, 8), 256)
    tkv = min(_round_up(N, 8), 512)
    scale = 1.0 / math.sqrt(dim_head)

    ctx = pl.pallas_call(
        functools.partial(_flash_attention_kernel, heads=heads,
                          dim_head=dim_head, tkv=tkv, scale=scale),
        out_shape=jax.ShapeDtypeStruct((B, N, inner), x.dtype),
        grid_spec=pltpu.PrefetchScalarGridSpec(
            num_scalar_prefetch=1,                    # input_lengths -> SMEM
            grid=(B, pl.cdiv(N, tq), pl.cdiv(N, tkv)),
            in_specs=[
                pl.BlockSpec((None, tq, inner), lambda b, i, kv, lens: (b, i, 0)),
                pl.BlockSpec((None, tkv, inner), lambda b, i, kv, lens: (b, kv, 0)),
                pl.BlockSpec((None, tkv, inner), lambda b, i, kv, lens: (b, kv, 0)),
            ],
            out_specs=pl.BlockSpec((None, tq, inner),
                                   lambda b, i, kv, lens: (b, i, 0)),
            scratch_shapes=[
                pltpu.VMEM((heads, tq, 1), jnp.float32),          # running max
                pltpu.VMEM((heads, tq, 1), jnp.float32),          # running denom
                pltpu.VMEM((heads, tq, dim_head), jnp.float32),   # running acc
            ],
        ),
        compiler_params=pltpu.CompilerParams(
            dimension_semantics=("parallel", "parallel", "arbitrary"),
            vmem_limit_bytes=48 * 1024 * 1024),
    )(input_lengths, q3, k3, v3)

    ctx2 = ctx.reshape(M, inner)                       # pure reshape

    # query-side length mask, applied AFTER the output projection (matches reference)
    qmask = (jnp.arange(N, dtype=jnp.int32)[None, :] <
             input_lengths[:, None]).astype(x.dtype).reshape(M, 1)

    out = pl.pallas_call(
        _out_proj_kernel,
        out_shape=jax.ShapeDtypeStruct((M, dim), x.dtype),
        grid_spec=pltpu.PrefetchScalarGridSpec(
            num_scalar_prefetch=0,
            grid=(pl.cdiv(M, tm),),
            in_specs=[
                pl.BlockSpec((tm, inner), lambda i: (i, 0)),    # context tile
                pl.BlockSpec((inner, dim), lambda i: (0, 0)),   # W_out (resident)
                pl.BlockSpec((1, dim), lambda i: (0, 0)),       # b_out
                pl.BlockSpec((tm, 1), lambda i: (i, 0)),        # query mask
            ],
            out_specs=pl.BlockSpec((tm, dim), lambda i: (i, 0)),
        ),
        compiler_params=proj_params,
    )(ctx2, wo, bo.reshape(1, dim), qmask)

    return out.reshape(B, N, dim)


# --------------------------------------------------------------------------
# Pure-JAX reference (mirrors the PyTorch/TRT-LLM module semantics)
# --------------------------------------------------------------------------

def _reference(x, rope_cos, rope_sin, input_lengths, wq, bq, wk, bk, wv, bv,
               wo, bo, heads, dim_head):
    B, N, dim = x.shape
    inner = heads * dim_head
    rot_dim = rope_cos.shape[-1]

    q = x @ wq + bq
    k = x @ wk + bk
    v = x @ wv + bv

    def rope(t):
        tr = t[..., :rot_dim]
        x1 = tr[..., 0::2]
        x2 = tr[..., 1::2]
        rot = jnp.stack([-x2, x1], axis=-1).reshape(tr.shape)
        return jnp.concatenate([tr * rope_cos + rot * rope_sin,
                                t[..., rot_dim:]], axis=-1)

    q = rope(q)
    k = rope(k)

    qh = q.reshape(B, N, heads, dim_head).transpose(0, 2, 1, 3)
    kh = k.reshape(B, N, heads, dim_head).transpose(0, 2, 1, 3)
    vh = v.reshape(B, N, heads, dim_head).transpose(0, 2, 1, 3)

    scale = 1.0 / math.sqrt(dim_head)
    s = jnp.einsum("bhqd,bhkd->bhqk", qh, kh) * scale
    key_valid = jnp.arange(N)[None, :] < input_lengths[:, None]      # (B, N)
    s = jnp.where(key_valid[:, None, None, :], s, -1e30)
    p = jax.nn.softmax(s, axis=-1)
    ctx = jnp.einsum("bhqk,bhkd->bhqd", p, vh)
    ctx = ctx.transpose(0, 2, 1, 3).reshape(B, N, inner)

    out = ctx @ wo + bo
    return out * key_valid.astype(out.dtype)[..., None]


# --------------------------------------------------------------------------
# Demo
# --------------------------------------------------------------------------

if __name__ == "__main__":
    B, N, dim = 2, 8, 64
    heads, dim_head = 4, 64
    inner = heads * dim_head            # 256
    rot_dim = 128                       # rotate first 128 channels, leave 128 unrotated

    key = jax.random.PRNGKey(0)
    keys = jax.random.split(key, 9)

    x = jax.random.normal(keys[0], (B, N, dim), dtype=jnp.float32)

    # standard interleaved rope tables: cos/sin repeated per (even, odd) pair
    pos = jnp.arange(N, dtype=jnp.float32)
    inv_freq = 1.0 / (10000.0 ** (jnp.arange(0, rot_dim, 2, dtype=jnp.float32) / rot_dim))
    ang = pos[:, None] * inv_freq[None, :]                          # (N, rot_dim // 2)
    rope_cos = jnp.tile(jnp.repeat(jnp.cos(ang), 2, axis=-1)[None], (B, 1, 1))
    rope_sin = jnp.tile(jnp.repeat(jnp.sin(ang), 2, axis=-1)[None], (B, 1, 1))

    input_lengths = jnp.array([N, 5], dtype=jnp.int32)

    def init_linear(kw, kb, fan_in, fan_out):
        bound = 1.0 / math.sqrt(fan_in)
        w = jax.random.uniform(kw, (fan_in, fan_out), minval=-bound, maxval=bound,
                               dtype=jnp.float32)
        b = jax.random.uniform(kb, (fan_out,), minval=-bound, maxval=bound,
                               dtype=jnp.float32)
        return w, b

    wq, bq = init_linear(keys[1], keys[2], dim, inner)
    wk, bk = init_linear(keys[3], keys[4], dim, inner)
    wv, bv = init_linear(keys[5], keys[6], dim, inner)
    wo, bo = init_linear(keys[7], keys[8], inner, dim)

    out = attention_forward(x, rope_cos, rope_sin, input_lengths,
                            wq, bq, wk, bk, wv, bv, wo, bo,
                            heads=heads, dim_head=dim_head)
    out = jax.block_until_ready(out)

    ref = _reference(x, rope_cos, rope_sin, input_lengths,
                     wq, bq, wk, bk, wv, bv, wo, bo, heads, dim_head)

    assert out.shape == (B, N, dim), out.shape
    max_err = float(jnp.max(jnp.abs(out - ref)))
    # approx reciprocal (EUP) in the softmax finalize => slightly loosened tolerance
    assert jnp.allclose(out, ref, atol=2e-3, rtol=2e-3), max_err

    print("KERNEL_OK")
</pallas_src>

<mosaic_0001>
module attributes {stable_mosaic.version = 11 : i64} {
  func.func @_qkv_rope_kernel(%arg0: i32, %arg1: memref<16x64xf32, #tpu.memory_space<vmem>>, %arg2: memref<64x768xf32, #tpu.memory_space<vmem>>, %arg3: memref<1x768xf32, #tpu.memory_space<vmem>>, %arg4: memref<16x128xf32, #tpu.memory_space<vmem>>, %arg5: memref<16x128xf32, #tpu.memory_space<vmem>>, %arg6: memref<16x256xf32, #tpu.memory_space<vmem>>, %arg7: memref<16x256xf32, #tpu.memory_space<vmem>>, %arg8: memref<16x256xf32, #tpu.memory_space<vmem>>) attributes {dimension_semantics = [#tpu.dimension_semantics<parallel>], iteration_bounds = array<i64: 1>, scalar_prefetch = 0 : i64, scratch_operands = 0 : i64, tpu.core_type = #tpu.core_type<tc>, window_params = [{transform_indices = @transform_0, window_bounds = array<i64: 16, 64>}, {pipeline_mode = #tpu.pipeline_mode<synchronous>, transform_indices = @transform_1, window_bounds = array<i64: 64, 768>}, {pipeline_mode = #tpu.pipeline_mode<synchronous>, transform_indices = @transform_2, window_bounds = array<i64: 1, 768>}, {transform_indices = @transform_3, window_bounds = array<i64: 16, 128>}, {transform_indices = @transform_4, window_bounds = array<i64: 16, 128>}, {transform_indices = @transform_5, window_bounds = array<i64: 16, 256>}, {transform_indices = @transform_6, window_bounds = array<i64: 16, 256>}, {transform_indices = @transform_7, window_bounds = array<i64: 16, 256>}]} {
    %c0 = arith.constant 0 : index
    %c0_0 = arith.constant 0 : index
    %0 = vector.load %arg1[%c0, %c0_0] : memref<16x64xf32, #tpu.memory_space<vmem>>, vector<16x64xf32>
    %c0_1 = arith.constant 0 : index
    %c0_2 = arith.constant 0 : index
    %1 = vector.load %arg2[%c0_1, %c0_2] : memref<64x768xf32, #tpu.memory_space<vmem>>, vector<64x768xf32>
    %cst = arith.constant dense<0.000000e+00> : vector<16x768xf32>
    %2 = tpu.matmul %0, %1, %cst {dimension_numbers = #tpu.dot_dimension_numbers<[1], [0], [0], [1], [0, 0, 1, 1], [], []>} : vector<16x64xf32>, vector<64x768xf32>, vector<16x768xf32> -> vector<16x768xf32>
    %c0_3 = arith.constant 0 : index
    %c0_4 = arith.constant 0 : index
    %3 = vector.load %arg3[%c0_3, %c0_4] : memref<1x768xf32, #tpu.memory_space<vmem>>, vector<1x768xf32>
    %4 = vector.broadcast %3 : vector<1x768xf32> to vector<16x768xf32>
    %5 = arith.addf %2, %4 : vector<16x768xf32>
    %6 = vector.extract_strided_slice %5 {offsets = [0, 0], sizes = [16, 256], strides = [1, 1]} : vector<16x768xf32> to vector<16x256xf32>
    %7 = vector.extract_strided_slice %5 {offsets = [0, 256], sizes = [16, 256], strides = [1, 1]} : vector<16x768xf32> to vector<16x256xf32>
    %8 = vector.extract_strided_slice %5 {offsets = [0, 512], sizes = [16, 256], strides = [1, 1]} : vector<16x768xf32> to vector<16x256xf32>
    %c0_5 = arith.constant 0 : index
    %c0_6 = arith.constant 0 : index
    %9 = vector.load %arg4[%c0_5, %c0_6] : memref<16x128xf32, #tpu.memory_space<vmem>>, vector<16x128xf32>
    %c0_7 = arith.constant 0 : index
    %c0_8 = arith.constant 0 : index
    %10 = vector.load %arg5[%c0_7, %c0_8] : memref<16x128xf32, #tpu.memory_space<vmem>>, vector<16x128xf32>
    %11 = tpu.iota {dimensions = array<i32: 1>} : vector<16x128xi32>
    %c2_i32 = arith.constant 2 : i32
    %c0_i32 = arith.constant 0 : i32
    %12 = arith.cmpi eq, %c2_i32, %c0_i32 : i32
    %c1_i32 = arith.constant 1 : i32
    %13 = arith.select %12, %c1_i32, %c2_i32 : i32
    %14 = vector.broadcast %13 : i32 to vector<16x128xi32>
    %15 = arith.remsi %11, %14 : vector<16x128xi32>
    %c0_i32_9 = arith.constant 0 : i32
    %16 = vector.broadcast %c0_i32_9 : i32 to vector<16x128xi32>
    %17 = arith.cmpi ne, %15, %16 : vector<16x128xi32>
    %c0_i32_10 = arith.constant 0 : i32
    %18 = vector.broadcast %c0_i32_10 : i32 to vector<16x128xi32>
    %19 = arith.cmpi slt, %15, %18 : vector<16x128xi32>
    %c0_i32_11 = arith.constant 0 : i32
    %20 = arith.cmpi slt, %13, %c0_i32_11 : i32
    %21 = vector.broadcast %20 : i1 to vector<16x128xi1>
    %22 = vector.broadcast %21 : vector<16x128xi1> to vector<16x128xi1>
    %23 = arith.xori %19, %22 : vector<16x128xi1>
    %24 = arith.andi %23, %17 : vector<16x128xi1>
    %25 = vector.broadcast %13 : i32 to vector<16x128xi32>
    %26 = arith.addi %15, %25 : vector<16x128xi32>
    %27 = arith.select %24, %26, %15 : vector<16x128xi1>, vector<16x128xi32>
    %c0_i32_12 = arith.constant 0 : i32
    %28 = vector.broadcast %c0_i32_12 : i32 to vector<16x128xi32>
    %29 = arith.cmpi eq, %27, %28 : vector<16x128xi32>
    %30 = vector.extract_strided_slice %6 {offsets = [0, 0], sizes = [16, 128], strides = [1, 1]} : vector<16x256xf32> to vector<16x128xf32>
    %31 = vector.extract_strided_slice %30 {offsets = [0, 1], sizes = [16, 127], strides = [1, 1]} : vector<16x128xf32> to vector<16x127xf32>
    %32 = vector.extract_strided_slice %30 {offsets = [0, 0], sizes = [16, 1], strides = [1, 1]} : vector<16x128xf32> to vector<16x1xf32>
    %33 = tpu.concatenate %31, %32 in 1 : vector<16x127xf32>, vector<16x1xf32> -> vector<16x128xf32>
    %34 = vector.extract_strided_slice %30 {offsets = [0, 127], sizes = [16, 1], strides = [1, 1]} : vector<16x128xf32> to vector<16x1xf32>
    %35 = vector.extract_strided_slice %30 {offsets = [0, 0], sizes = [16, 127], strides = [1, 1]} : vector<16x128xf32> to vector<16x127xf32>
    %36 = tpu.concatenate %34, %35 in 1 : vector<16x1xf32>, vector<16x127xf32> -> vector<16x128xf32>
    %cst_13 = arith.constant 0.000000e+00 : f32
    %37 = vector.broadcast %cst_13 : f32 to vector<16x128xf32>
    %38 = arith.subf %37, %33 : vector<16x128xf32>
    %39 = arith.select %29, %38, %36 : vector<16x128xi1>, vector<16x128xf32>
    %40 = arith.mulf %30, %9 : vector<16x128xf32>
    %41 = arith.mulf %39, %10 : vector<16x128xf32>
    %42 = arith.addf %40, %41 : vector<16x128xf32>
    %c0_14 = arith.constant 0 : index
    %c0_15 = arith.constant 0 : index
    %43 = vector.load %arg6[%c0_14, %c0_15] : memref<16x256xf32, #tpu.memory_space<vmem>>, vector<16x128xf32>
    tpu.vector_store %arg6[%c0_14, %c0_15], %42 {strides = array<i32>} : memref<16x256xf32, #tpu.memory_space<vmem>>, vector<16x128xf32>,
    %44 = vector.extract_strided_slice %7 {offsets = [0, 0], sizes = [16, 128], strides = [1, 1]} : vector<16x256xf32> to vector<16x128xf32>
    %45 = vector.extract_strided_slice %44 {offsets = [0, 1], sizes = [16, 127], strides = [1, 1]} : vector<16x128xf32> to vector<16x127xf32>
    %46 = vector.extract_strided_slice %44 {offsets = [0, 0], sizes = [16, 1], strides = [1, 1]} : vector<16x128xf32> to vector<16x1xf32>
    %47 = tpu.concatenate %45, %46 in 1 : vector<16x127xf32>, vector<16x1xf32> -> vector<16x128xf32>
    %48 = vector.extract_strided_slice %44 {offsets = [0, 127], sizes = [16, 1], strides = [1, 1]} : vector<16x128xf32> to vector<16x1xf32>
    %49 = vector.extract_strided_slice %44 {offsets = [0, 0], sizes = [16, 127], strides = [1, 1]} : vector<16x128xf32> to vector<16x127xf32>
    %50 = tpu.concatenate %48, %49 in 1 : vector<16x1xf32>, vector<16x127xf32> -> vector<16x128xf32>
    %cst_16 = arith.constant 0.000000e+00 : f32
    %51 = vector.broadcast %cst_16 : f32 to vector<16x128xf32>
    %52 = arith.subf %51, %47 : vector<16x128xf32>
    %53 = arith.select %29, %52, %50 : vector<16x128xi1>, vector<16x128xf32>
    %54 = arith.mulf %44, %9 : vector<16x128xf32>
    %55 = arith.mulf %53, %10 : vector<16x128xf32>
    %56 = arith.addf %54, %55 : vector<16x128xf32>
    %c0_17 = arith.constant 0 : index
    %c0_18 = arith.constant 0 : index
    %57 = vector.load %arg7[%c0_17, %c0_18] : memref<16x256xf32, #tpu.memory_space<vmem>>, vector<16x128xf32>
    tpu.vector_store %arg7[%c0_17, %c0_18], %56 {strides = array<i32>} : memref<16x256xf32, #tpu.memory_space<vmem>>, vector<16x128xf32>,
    %58 = vector.extract_strided_slice %6 {offsets = [0, 128], sizes = [16, 128], strides = [1, 1]} : vector<16x256xf32> to vector<16x128xf32>
    %c0_19 = arith.constant 0 : index
    %c128 = arith.constant 128 : index
    %59 = vector.load %arg6[%c0_19, %c128] : memref<16x256xf32, #tpu.memory_space<vmem>>, vector<16x128xf32>
    tpu.vector_store %arg6[%c0_19, %c128], %58 {strides = array<i32>} : memref<16x256xf32, #tpu.memory_space<vmem>>, vector<16x128xf32>,
    %60 = vector.extract_strided_slice %7 {offsets = [0, 128], sizes = [16, 128], strides = [1, 1]} : vector<16x256xf32> to vector<16x128xf32>
    %c0_20 = arith.constant 0 : index
    %c128_21 = arith.constant 128 : index
    %61 = vector.load %arg7[%c0_20, %c128_21] : memref<16x256xf32, #tpu.memory_space<vmem>>, vector<16x128xf32>
    tpu.vector_store %arg7[%c0_20, %c128_21], %60 {strides = array<i32>} : memref<16x256xf32, #tpu.memory_space<vmem>>, vector<16x128xf32>,
    %c0_22 = arith.constant 0 : index
    %c0_23 = arith.constant 0 : index
    %62 = vector.load %arg8[%c0_22, %c0_23] : memref<16x256xf32, #tpu.memory_space<vmem>>, vector<16x256xf32>
    tpu.vector_store %arg8[%c0_22, %c0_23], %8 {strides = array<i32>} : memref<16x256xf32, #tpu.memory_space<vmem>>, vector<16x256xf32>,
    return
  }
  func.func @transform_0(%arg0: i32) -> (i32, i32) {
    %c0_i32 = arith.constant 0 : i32
    %c0_i32_0 = arith.constant 0 : i32
    return %arg0, %c0_i32 : i32, i32
  }
  func.func @transform_1(%arg0: i32) -> (i32, i32) {
    %c0_i32 = arith.constant 0 : i32
    %c0_i32_0 = arith.constant 0 : i32
    %c0_i32_1 = arith.constant 0 : i32
    return %c0_i32, %c0_i32_0 : i32, i32
  }
  func.func @transform_2(%arg0: i32) -> (i32, i32) {
    %c0_i32 = arith.constant 0 : i32
    %c0_i32_0 = arith.constant 0 : i32
    %c0_i32_1 = arith.constant 0 : i32
    return %c0_i32, %c0_i32_0 : i32, i32
  }
  func.func @transform_3(%arg0: i32) -> (i32, i32) {
    %c0_i32 = arith.constant 0 : i32
    %c0_i32_0 = arith.constant 0 : i32
    return %arg0, %c0_i32 : i32, i32
  }
  func.func @transform_4(%arg0: i32) -> (i32, i32) {
    %c0_i32 = arith.constant 0 : i32
    %c0_i32_0 = arith.constant 0 : i32
    return %arg0, %c0_i32 : i32, i32
  }
  func.func @transform_5(%arg0: i32) -> (i32, i32) {
    %c0_i32 = arith.constant 0 : i32
    %c0_i32_0 = arith.constant 0 : i32
    return %arg0, %c0_i32 : i32, i32
  }
  func.func @transform_6(%arg0: i32) -> (i32, i32) {
    %c0_i32 = arith.constant 0 : i32
    %c0_i32_0 = arith.constant 0 : i32
    return %arg0, %c0_i32 : i32, i32
  }
  func.func @transform_7(%arg0: i32) -> (i32, i32) {
    %c0_i32 = arith.constant 0 : i32
    %c0_i32_0 = arith.constant 0 : i32
    return %arg0, %c0_i32 : i32, i32
  }
}

module attributes {stable_mosaic.version = 11 : i64} {
  func.func @_flash_attention_kernel(%arg0: i32, %arg1: i32, %arg2: i32, %arg3: memref<2xi32, #tpu.memory_space<smem>>, %arg4: memref<1x8x256xf32, #tpu.memory_space<vmem>>, %arg5: memref<1x8x256xf32, #tpu.memory_space<vmem>>, %arg6: memref<1x8x256xf32, #tpu.memory_space<vmem>>, %arg7: memref<1x8x256xf32, #tpu.memory_space<vmem>>, %arg8: memref<4x8x1xf32, #tpu.memory_space<vmem>>, %arg9: memref<4x8x1xf32, #tpu.memory_space<vmem>>, %arg10: memref<4x8x64xf32, #tpu.memory_space<vmem>>) attributes {dimension_semantics = [#tpu.dimension_semantics<parallel>, #tpu.dimension_semantics<parallel>, #tpu.dimension_semantics<arbitrary>], iteration_bounds = array<i64: 2, 1, 1>, scalar_prefetch = 1 : i64, scratch_operands = 3 : i64, tpu.core_type = #tpu.core_type<tc>, window_params = [{transform_indices = @transform_0, window_bounds = array<i64: 1, 8, 256>}, {transform_indices = @transform_1, window_bounds = array<i64: 1, 8, 256>}, {transform_indices = @transform_2, window_bounds = array<i64: 1, 8, 256>}, {transform_indices = @transform_3, window_bounds = array<i64: 1, 8, 256>}]} {
    %0 = arith.index_cast %arg0 : i32 to index
    %1 = memref.load %arg3[%0] : memref<2xi32, #tpu.memory_space<smem>>
    %c0_i32 = arith.constant 0 : i32
    %2 = arith.cmpi eq, %arg2, %c0_i32 : i32
    %3 = arith.extui %2 : i1 to i32
    %c0_i32_0 = arith.constant 0 : i32
    %4 = arith.cmpi ne, %3, %c0_i32_0 : i32
    scf.if %4 {
      %cst = arith.constant 0xFF800000 : f32
      %12 = vector.broadcast %cst : f32 to vector<4x8x1xf32>
      %c0 = arith.constant 0 : index
      %c0_4 = arith.constant 0 : index
      %c0_5 = arith.constant 0 : index
      %13 = vector.load %arg8[%c0, %c0_4, %c0_5] : memref<4x8x1xf32, #tpu.memory_space<vmem>>, vector<4x8x1xf32>
      tpu.vector_store %arg8[%c0, %c0_4, %c0_5], %12 {strides = array<i32>} : memref<4x8x1xf32, #tpu.memory_space<vmem>>, vector<4x8x1xf32>,
      %cst_6 = arith.constant 0.000000e+00 : f32
      %14 = vector.broadcast %cst_6 : f32 to vector<4x8x1xf32>
      %c0_7 = arith.constant 0 : index
      %c0_8 = arith.constant 0 : index
      %c0_9 = arith.constant 0 : index
      %15 = vector.load %arg9[%c0_7, %c0_8, %c0_9] : memref<4x8x1xf32, #tpu.memory_space<vmem>>, vector<4x8x1xf32>
      tpu.vector_store %arg9[%c0_7, %c0_8, %c0_9], %14 {strides = array<i32>} : memref<4x8x1xf32, #tpu.memory_space<vmem>>, vector<4x8x1xf32>,
      %cst_10 = arith.constant 0.000000e+00 : f32
      %16 = vector.broadcast %cst_10 : f32 to vector<4x8x64xf32>
      %c0_11 = arith.constant 0 : index
      %c0_12 = arith.constant 0 : index
      %c0_13 = arith.constant 0 : index
      %17 = vector.load %arg10[%c0_11, %c0_12, %c0_13] : memref<4x8x64xf32, #tpu.memory_space<vmem>>, vector<4x8x64xf32>
      tpu.vector_store %arg10[%c0_11, %c0_12, %c0_13], %16 {strides = array<i32>} : memref<4x8x64xf32, #tpu.memory_space<vmem>>, vector<4x8x64xf32>,
    } else {
    }
    %c8_i32 = arith.constant 8 : i32
    %5 = arith.muli %arg2, %c8_i32 : i32
    %6 = arith.cmpi slt, %5, %1 : i32
    %7 = arith.extui %6 : i1 to i32
    %c0_i32_1 = arith.constant 0 : i32
    %8 = arith.cmpi ne, %7, %c0_i32_1 : i32
    scf.if %8 {
      %c0 = arith.constant 0 : index
      %c0_4 = arith.constant 0 : index
      %c0_5 = arith.constant 0 : index
      %12 = vector.load %arg4[%c0, %c0_4, %c0_5] : memref<1x8x256xf32, #tpu.memory_space<vmem>>, vector<1x8x256xf32>
      %13 = vector.shape_cast %12 : vector<1x8x256xf32> to vector<8x256xf32>
      %cst = arith.constant 1.250000e-01 : f32
      %14 = vector.broadcast %cst : f32 to vector<8x256xf32>
      %15 = arith.mulf %13, %14 : vector<8x256xf32>
      %c0_6 = arith.constant 0 : index
      %c0_7 = arith.constant 0 : index
      %c0_8 = arith.constant 0 : index
      %16 = vector.load %arg5[%c0_6, %c0_7, %c0_8] : memref<1x8x256xf32, #tpu.memory_space<vmem>>, vector<1x8x256xf32>
      %17 = vector.shape_cast %16 : vector<1x8x256xf32> to vector<8x256xf32>
      %c0_9 = arith.constant 0 : index
      %c0_10 = arith.constant 0 : index
      %c0_11 = arith.constant 0 : index
      %18 = vector.load %arg6[%c0_9, %c0_10, %c0_11] : memref<1x8x256xf32, #tpu.memory_space<vmem>>, vector<1x8x256xf32>
      %19 = vector.shape_cast %18 : vector<1x8x256xf32> to vector<8x256xf32>
      %20 = tpu.iota {dimensions = array<i32: 1>} : vector<8x8xi32>
      %21 = vector.broadcast %5 : i32 to vector<8x8xi32>
      %22 = arith.addi %21, %20 : vector<8x8xi32>
      %23 = vector.broadcast %1 : i32 to vector<8x8xi32>
      %24 = arith.cmpi slt, %22, %23 : vector<8x8xi32>
      %25 = tpu.iota {dimensions = array<i32: 0>} : vector<8x1xi32>
      %26 = vector.broadcast %5 : i32 to vector<8x1xi32>
      %27 = arith.addi %26, %25 : vector<8x1xi32>
      %28 = vector.broadcast %1 : i32 to vector<8x1xi32>
      %29 = arith.cmpi slt, %27, %28 : vector<8x1xi32>
      %cst_12 = arith.constant 0.000000e+00 : f32
      %30 = vector.shape_cast %29 : vector<8x1xi1> to vector<8x1xi1>
      %31 = vector.broadcast %30 : vector<8x1xi1> to vector<8x256xi1>
      %32 = vector.broadcast %cst_12 : f32 to vector<8x256xf32>
      %33 = arith.select %31, %19, %32 : vector<8x256xi1>, vector<8x256xf32>
      %34 = vector.extract_strided_slice %15 {offsets = [0, 0], sizes = [8, 64], strides = [1, 1]} : vector<8x256xf32> to vector<8x64xf32>
      %35 = vector.extract_strided_slice %17 {offsets = [0, 0], sizes = [8, 64], strides = [1, 1]} : vector<8x256xf32> to vector<8x64xf32>
      %36 = vector.extract_strided_slice %33 {offsets = [0, 0], sizes = [8, 64], strides = [1, 1]} : vector<8x256xf32> to vector<8x64xf32>
      %cst_13 = arith.constant dense<0.000000e+00> : vector<8x8xf32>
      %37 = tpu.matmul %34, %35, %cst_13 {dimension_numbers = #tpu.dot_dimension_numbers<[1], [1], [0], [0], [0, 0, 1, 0], [], []>} : vector<8x64xf32>, vector<8x64xf32>, vector<8x8xf32> -> vector<8x8xf32>
      %cst_14 = arith.constant -1.000000e+30 : f32
      %38 = vector.broadcast %cst_14 : f32 to vector<8x8xf32>
      %39 = arith.select %24, %37, %38 : vector<8x8xi1>, vector<8x8xf32>
      %c0_15 = arith.constant 0 : index
      %c0_16 = arith.constant 0 : index
      %c0_17 = arith.constant 0 : index
      %40 = vector.load %arg8[%c0_15, %c0_16, %c0_17] : memref<4x8x1xf32, #tpu.memory_space<vmem>>, vector<1x8x1xf32>
      %41 = vector.shape_cast %40 : vector<1x8x1xf32> to vector<8x1xf32>
      %cst_18 = arith.constant dense<0xFF800000> : vector<8xf32>
      %42 = vector.multi_reduction <maximumf>, %39, %cst_18 [1] : vector<8x8xf32> to vector<8xf32>
      %43 = vector.shape_cast %42 : vector<8xf32> to vector<8x1xf32>
      %44 = arith.maximumf %41, %43 : vector<8x1xf32>
      %45 = arith.subf %41, %44 : vector<8x1xf32>
      %46 = math.exp %45 : vector<8x1xf32>
      %47 = vector.broadcast %44 : vector<8x1xf32> to vector<8x8xf32>
      %48 = arith.subf %39, %47 : vector<8x8xf32>
      %49 = math.exp %48 : vector<8x8xf32>
      %c0_19 = arith.constant 0 : index
      %c0_20 = arith.constant 0 : index
      %c0_21 = arith.constant 0 : index
      %50 = vector.load %arg9[%c0_19, %c0_20, %c0_21] : memref<4x8x1xf32, #tpu.memory_space<vmem>>, vector<1x8x1xf32>
      %51 = vector.shape_cast %50 : vector<1x8x1xf32> to vector<8x1xf32>
      %52 = arith.mulf %46, %51 : vector<8x1xf32>
      %cst_22 = arith.constant dense<0.000000e+00> : vector<8xf32>
      %53 = vector.multi_reduction <add>, %49, %cst_22 [1] : vector<8x8xf32> to vector<8xf32>
      %54 = vector.shape_cast %53 : vector<8xf32> to vector<8x1xf32>
      %55 = arith.addf %52, %54 : vector<8x1xf32>
      %c0_23 = arith.constant 0 : index
      %c0_24 = arith.constant 0 : index
      %c0_25 = arith.constant 0 : index
      %56 = vector.load %arg9[%c0_23, %c0_24, %c0_25] : memref<4x8x1xf32, #tpu.memory_space<vmem>>, vector<1x8x1xf32>
      %57 = vector.shape_cast %56 : vector<1x8x1xf32> to vector<8x1xf32>
      %58 = vector.shape_cast %55 : vector<8x1xf32> to vector<1x8x1xf32>
      tpu.vector_store %arg9[%c0_23, %c0_24, %c0_25], %58 {strides = array<i32>} : memref<4x8x1xf32, #tpu.memory_space<vmem>>, vector<1x8x1xf32>,
      %c0_26 = arith.constant 0 : index
      %c0_27 = arith.constant 0 : index
      %c0_28 = arith.constant 0 : index
      %59 = vector.load %arg10[%c0_26, %c0_27, %c0_28] : memref<4x8x64xf32, #tpu.memory_space<vmem>>, vector<1x8x64xf32>
      %60 = vector.shape_cast %59 : vector<1x8x64xf32> to vector<8x64xf32>
      %61 = vector.broadcast %46 : vector<8x1xf32> to vector<8x64xf32>
      %62 = arith.mulf %61, %60 : vector<8x64xf32>
      %cst_29 = arith.constant dense<0.000000e+00> : vector<8x64xf32>
      %63 = tpu.matmul %49, %36, %cst_29 {dimension_numbers = #tpu.dot_dimension_numbers<[1], [0], [0], [1], [0, 0, 1, 1], [], []>} : vector<8x8xf32>, vector<8x64xf32>, vector<8x64xf32> -> vector<8x64xf32>
      %64 = arith.addf %62, %63 : vector<8x64xf32>
      %c0_30 = arith.constant 0 : index
      %c0_31 = arith.constant 0 : index
      %c0_32 = arith.constant 0 : index
      %65 = vector.load %arg10[%c0_30, %c0_31, %c0_32] : memref<4x8x64xf32, #tpu.memory_space<vmem>>, vector<1x8x64xf32>
      %66 = vector.shape_cast %65 : vector<1x8x64xf32> to vector<8x64xf32>
      %67 = vector.shape_cast %64 : vector<8x64xf32> to vector<1x8x64xf32>
      tpu.vector_store %arg10[%c0_30, %c0_31, %c0_32], %67 {strides = array<i32>} : memref<4x8x64xf32, #tpu.memory_space<vmem>>, vector<1x8x64xf32>,
      %c0_33 = arith.constant 0 : index
      %c0_34 = arith.constant 0 : index
      %c0_35 = arith.constant 0 : index
      %68 = vector.load %arg8[%c0_33, %c0_34, %c0_35] : memref<4x8x1xf32, #tpu.memory_space<vmem>>, vector<1x8x1xf32>
      %69 = vector.shape_cast %68 : vector<1x8x1xf32> to vector<8x1xf32>
      %70 = vector.shape_cast %44 : vector<8x1xf32> to vector<1x8x1xf32>
      tpu.vector_store %arg8[%c0_33, %c0_34, %c0_35], %70 {strides = array<i32>} : memref<4x8x1xf32, #tpu.memory_space<vmem>>, vector<1x8x1xf32>,
      %71 = vector.extract_strided_slice %15 {offsets = [0, 64], sizes = [8, 64], strides = [1, 1]} : vector<8x256xf32> to vector<8x64xf32>
      %72 = vector.extract_strided_slice %17 {offsets = [0, 64], sizes = [8, 64], strides = [1, 1]} : vector<8x256xf32> to vector<8x64xf32>
      %73 = vector.extract_strided_slice %33 {offsets = [0, 64], sizes = [8, 64], strides = [1, 1]} : vector<8x256xf32> to vector<8x64xf32>
      %cst_36 = arith.constant dense<0.000000e+00> : vector<8x8xf32>
      %74 = tpu.matmul %71, %72, %cst_36 {dimension_numbers = #tpu.dot_dimension_numbers<[1], [1], [0], [0], [0, 0, 1, 0], [], []>} : vector<8x64xf32>, vector<8x64xf32>, vector<8x8xf32> -> vector<8x8xf32>
      %cst_37 = arith.constant -1.000000e+30 : f32
      %75 = vector.broadcast %cst_37 : f32 to vector<8x8xf32>
      %76 = arith.select %24, %74, %75 : vector<8x8xi1>, vector<8x8xf32>
      %c1 = arith.constant 1 : index
      %c0_38 = arith.constant 0 : index
      %c0_39 = arith.constant 0 : index
      %77 = vector.load %arg8[%c1, %c0_38, %c0_39] : memref<4x8x1xf32, #tpu.memory_space<vmem>>, vector<1x8x1xf32>
      %78 = vector.shape_cast %77 : vector<1x8x1xf32> to vector<8x1xf32>
      %cst_40 = arith.constant dense<0xFF800000> : vector<8xf32>
      %79 = vector.multi_reduction <maximumf>, %76, %cst_40 [1] : vector<8x8xf32> to vector<8xf32>
      %80 = vector.shape_cast %79 : vector<8xf32> to vector<8x1xf32>
      %81 = arith.maximumf %78, %80 : vector<8x1xf32>
      %82 = arith.subf %78, %81 : vector<8x1xf32>
      %83 = math.exp %82 : vector<8x1xf32>
      %84 = vector.broadcast %81 : vector<8x1xf32> to vector<8x8xf32>
      %85 = arith.subf %76, %84 : vector<8x8xf32>
      %86 = math.exp %85 : vector<8x8xf32>
      %c1_41 = arith.constant 1 : index
      %c0_42 = arith.constant 0 : index
      %c0_43 = arith.constant 0 : index
      %87 = vector.load %arg9[%c1_41, %c0_42, %c0_43] : memref<4x8x1xf32, #tpu.memory_space<vmem>>, vector<1x8x1xf32>
      %88 = vector.shape_cast %87 : vector<1x8x1xf32> to vector<8x1xf32>
      %89 = arith.mulf %83, %88 : vector<8x1xf32>
      %cst_44 = arith.constant dense<0.000000e+00> : vector<8xf32>
      %90 = vector.multi_reduction <add>, %86, %cst_44 [1] : vector<8x8xf32> to vector<8xf32>
      %91 = vector.shape_cast %90 : vector<8xf32> to vector<8x1xf32>
      %92 = arith.addf %89, %91 : vector<8x1xf32>
      %c1_45 = arith.constant 1 : index
      %c0_46 = arith.constant 0 : index
      %c0_47 = arith.constant 0 : index
      %93 = vector.load %arg9[%c1_45, %c0_46, %c0_47] : memref<4x8x1xf32, #tpu.memory_space<vmem>>, vector<1x8x1xf32>
      %94 = vector.shape_cast %93 : vector<1x8x1xf32> to vector<8x1xf32>
      %95 = vector.shape_cast %92 : vector<8x1xf32> to vector<1x8x1xf32>
      tpu.vector_store %arg9[%c1_45, %c0_46, %c0_47], %95 {strides = array<i32>} : memref<4x8x1xf32, #tpu.memory_space<vmem>>, vector<1x8x1xf32>,
      %c1_48 = arith.constant 1 : index
      %c0_49 = arith.constant 0 : index
      %c0_50 = arith.constant 0 : index
      %96 = vector.load %arg10[%c1_48, %c0_49, %c0_50] : memref<4x8x64xf32, #tpu.memory_space<vmem>>, vector<1x8x64xf32>
      %97 = vector.shape_cast %96 : vector<1x8x64xf32> to vector<8x64xf32>
      %98 = vector.broadcast %83 : vector<8x1xf32> to vector<8x64xf32>
      %99 = arith.mulf %98, %97 : vector<8x64xf32>
      %cst_51 = arith.constant dense<0.000000e+00> : vector<8x64xf32>
      %100 = tpu.matmul %86, %73, %cst_51 {dimension_numbers = #tpu.dot_dimension_numbers<[1], [0], [0], [1], [0, 0, 1, 1], [], []>} : vector<8x8xf32>, vector<8x64xf32>, vector<8x64xf32> -> vector<8x64xf32>
      %101 = arith.addf %99, %100 : vector<8x64xf32>
      %c1_52 = arith.constant 1 : index
      %c0_53 = arith.constant 0 : index
      %c0_54 = arith.constant 0 : index
      %102 = vector.load %arg10[%c1_52, %c0_53, %c0_54] : memref<4x8x64xf32, #tpu.memory_space<vmem>>, vector<1x8x64xf32>
      %103 = vector.shape_cast %102 : vector<1x8x64xf32> to vector<8x64xf32>
      %104 = vector.shape_cast %101 : vector<8x64xf32> to vector<1x8x64xf32>
      tpu.vector_store %arg10[%c1_52, %c0_53, %c0_54], %104 {strides = array<i32>} : memref<4x8x64xf32, #tpu.memory_space<vmem>>, vector<1x8x64xf32>,
      %c1_55 = arith.constant 1 : index
      %c0_56 = arith.constant 0 : index
      %c0_57 = arith.constant 0 : index
      %105 = vector.load %arg8[%c1_55, %c0_56, %c0_57] : memref<4x8x1xf32, #tpu.memory_space<vmem>>, vector<1x8x1xf32>
      %106 = vector.shape_cast %105 : vector<1x8x1xf32> to vector<8x1xf32>
      %107 = vector.shape_cast %81 : vector<8x1xf32> to vector<1x8x1xf32>
      tpu.vector_store %arg8[%c1_55, %c0_56, %c0_57], %107 {strides = array<i32>} : memref<4x8x1xf32, #tpu.memory_space<vmem>>, vector<1x8x1xf32>,
      %108 = vector.extract_strided_slice %15 {offsets = [0, 128], sizes = [8, 64], strides = [1, 1]} : vector<8x256xf32> to vector<8x64xf32>
      %109 = vector.extract_strided_slice %17 {offsets = [0, 128], sizes = [8, 64], strides = [1, 1]} : vector<8x256xf32> to vector<8x64xf32>
      %110 = vector.extract_strided_slice %33 {offsets = [0, 128], sizes = [8, 64], strides = [1, 1]} : vector<8x256xf32> to vector<8x64xf32>
      %cst_58 = arith.constant dense<0.000000e+00> : vector<8x8xf32>
      %111 = tpu.matmul %108, %109, %cst_58 {dimension_numbers = #tpu.dot_dimension_numbers<[1], [1], [0], [0], [0, 0, 1, 0], [], []>} : vector<8x64xf32>, vector<8x64xf32>, vector<8x8xf32> -> vector<8x8xf32>
      %cst_59 = arith.constant -1.000000e+30 : f32
      %112 = vector.broadcast %cst_59 : f32 to vector<8x8xf32>
      %113 = arith.select %24, %111, %112 : vector<8x8xi1>, vector<8x8xf32>
      %c2 = arith.constant 2 : index
      %c0_60 = arith.constant 0 : index
      %c0_61 = arith.constant 0 : index
      %114 = vector.load %arg8[%c2, %c0_60, %c0_61] : memref<4x8x1xf32, #tpu.memory_space<vmem>>, vector<1x8x1xf32>
      %115 = vector.shape_cast %114 : vector<1x8x1xf32> to vector<8x1xf32>
      %cst_62 = arith.constant dense<0xFF800000> : vector<8xf32>
      %116 = vector.multi_reduction <maximumf>, %113, %cst_62 [1] : vector<8x8xf32> to vector<8xf32>
      %117 = vector.shape_cast %116 : vector<8xf32> to vector<8x1xf32>
      %118 = arith.maximumf %115, %117 : vector<8x1xf32>
      %119 = arith.subf %115, %118 : vector<8x1xf32>
      %120 = math.exp %119 : vector<8x1xf32>
      %121 = vector.broadcast %118 : vector<8x1xf32> to vector<8x8xf32>
      %122 = arith.subf %113, %121 : vector<8x8xf32>
      %123 = math.exp %122 : vector<8x8xf32>
      %c2_63 = arith.constant 2 : index
      %c0_64 = arith.constant 0 : index
      %c0_65 = arith.constant 0 : index
      %124 = vector.load %arg9[%c2_63, %c0_64, %c0_65] : memref<4x8x1xf32, #tpu.memory_space<vmem>>, vector<1x8x1xf32>
      %125 = vector.shape_cast %124 : vector<1x8x1xf32> to vector<8x1xf32>
      %126 = arith.mulf %120, %125 : vector<8x1xf32>
      %cst_66 = arith.constant dense<0.000000e+00> : vector<8xf32>
      %127 = vector.multi_reduction <add>, %123, %cst_66 [1] : vector<8x8xf32> to vector<8xf32>
      %128 = vector.shape_cast %127 : vector<8xf32> to vector<8x1xf32>
      %129 = arith.addf %126, %128 : vector<8x1xf32>
      %c2_67 = arith.constant 2 : index
      %c0_68 = arith.constant 0 : index
      %c0_69 = arith.constant 0 : index
      %130 = vector.load %arg9[%c2_67, %c0_68, %c0_69] : memref<4x8x1xf32, #tpu.memory_space<vmem>>, vector<1x8x1xf32>
      %131 = vector.shape_cast %130 : vector<1x8x1xf32> to vector<8x1xf32>
      %132 = vector.shape_cast %129 : vector<8x1xf32> to vector<1x8x1xf32>
      tpu.vector_store %arg9[%c2_67, %c0_68, %c0_69], %132 {strides = array<i32>} : memref<4x8x1xf32, #tpu.memory_space<vmem>>, vector<1x8x1xf32>,
      %c2_70 = arith.constant 2 : index
      %c0_71 = arith.constant 0 : index
      %c0_72 = arith.constant 0 : index
      %133 = vector.load %arg10[%c2_70, %c0_71, %c0_72] : memref<4x8x64xf32, #tpu.memory_space<vmem>>, vector<1x8x64xf32>
      %134 = vector.shape_cast %133 : vector<1x8x64xf32> to vector<8x64xf32>
      %135 = vector.broadcast %120 : vector<8x1xf32> to vector<8x64xf32>
      %136 = arith.mulf %135, %134 : vector<8x64xf32>
      %cst_73 = arith.constant dense<0.000000e+00> : vector<8x64xf32>
      %137 = tpu.matmul %123, %110, %cst_73 {dimension_numbers = #tpu.dot_dimension_numbers<[1], [0], [0], [1], [0, 0, 1, 1], [], []>} : vector<8x8xf32>, vector<8x64xf32>, vector<8x64xf32> -> vector<8x64xf32>
      %138 = arith.addf %136, %137 : vector<8x64xf32>
      %c2_74 = arith.constant 2 : index
      %c0_75 = arith.constant 0 : index
      %c0_76 = arith.constant 0 : index
      %139 = vector.load %arg10[%c2_74, %c0_75, %c0_76] : memref<4x8x64xf32, #tpu.memory_space<vmem>>, vector<1x8x64xf32>
      %140 = vector.shape_cast %139 : vector<1x8x64xf32> to vector<8x64xf32>
      %141 = vector.shape_cast %138 : vector<8x64xf32> to vector<1x8x64xf32>
      tpu.vector_store %arg10[%c2_74, %c0_75, %c0_76], %141 {strides = array<i32>} : memref<4x8x64xf32, #tpu.memory_space<vmem>>, vector<1x8x64xf32>,
      %c2_77 = arith.constant 2 : index
      %c0_78 = arith.constant 0 : index
      %c0_79 = arith.constant 0 : index
      %142 = vector.load %arg8[%c2_77, %c0_78, %c0_79] : memref<4x8x1xf32, #tpu.memory_space<vmem>>, vector<1x8x1xf32>
      %143 = vector.shape_cast %142 : vector<1x8x1xf32> to vector<8x1xf32>
      %144 = vector.shape_cast %118 : vector<8x1xf32> to vector<1x8x1xf32>
      tpu.vector_store %arg8[%c2_77, %c0_78, %c0_79], %144 {strides = array<i32>} : memref<4x8x1xf32, #tpu.memory_space<vmem>>, vector<1x8x1xf32>,
      %145 = vector.extract_strided_slice %15 {offsets = [0, 192], sizes = [8, 64], strides = [1, 1]} : vector<8x256xf32> to vector<8x64xf32>
      %146 = vector.extract_strided_slice %17 {offsets = [0, 192], sizes = [8, 64], strides = [1, 1]} : vector<8x256xf32> to vector<8x64xf32>
      %147 = vector.extract_strided_slice %33 {offsets = [0, 192], sizes = [8, 64], strides = [1, 1]} : vector<8x256xf32> to vector<8x64xf32>
      %cst_80 = arith.constant dense<0.000000e+00> : vector<8x8xf32>
      %148 = tpu.matmul %145, %146, %cst_80 {dimension_numbers = #tpu.dot_dimension_numbers<[1], [1], [0], [0], [0, 0, 1, 0], [], []>} : vector<8x64xf32>, vector<8x64xf32>, vector<8x8xf32> -> vector<8x8xf32>
      %cst_81 = arith.constant -1.000000e+30 : f32
      %149 = vector.broadcast %cst_81 : f32 to vector<8x8xf32>
      %150 = arith.select %24, %148, %149 : vector<8x8xi1>, vector<8x8xf32>
      %c3 = arith.constant 3 : index
      %c0_82 = arith.constant 0 : index
      %c0_83 = arith.constant 0 : index
      %151 = vector.load %arg8[%c3, %c0_82, %c0_83] : memref<4x8x1xf32, #tpu.memory_space<vmem>>, vector<1x8x1xf32>
      %152 = vector.shape_cast %151 : vector<1x8x1xf32> to vector<8x1xf32>
      %cst_84 = arith.constant dense<0xFF800000> : vector<8xf32>
      %153 = vector.multi_reduction <maximumf>, %150, %cst_84 [1] : vector<8x8xf32> to vector<8xf32>
      %154 = vector.shape_cast %153 : vector<8xf32> to vector<8x1xf32>
      %155 = arith.maximumf %152, %154 : vector<8x1xf32>
      %156 = arith.subf %152, %155 : vector<8x1xf32>
      %157 = math.exp %156 : vector<8x1xf32>
      %158 = vector.broadcast %155 : vector<8x1xf32> to vector<8x8xf32>
      %159 = arith.subf %150, %158 : vector<8x8xf32>
      %160 = math.exp %159 : vector<8x8xf32>
      %c3_85 = arith.constant 3 : index
      %c0_86 = arith.constant 0 : index
      %c0_87 = arith.constant 0 : index
      %161 = vector.load %arg9[%c3_85, %c0_86, %c0_87] : memref<4x8x1xf32, #tpu.memory_space<vmem>>, vector<1x8x1xf32>
      %162 = vector.shape_cast %161 : vector<1x8x1xf32> to vector<8x1xf32>
      %163 = arith.mulf %157, %162 : vector<8x1xf32>
      %cst_88 = arith.constant dense<0.000000e+00> : vector<8xf32>
      %164 = vector.multi_reduction <add>, %160, %cst_88 [1] : vector<8x8xf32> to vector<8xf32>
      %165 = vector.shape_cast %164 : vector<8xf32> to vector<8x1xf32>
      %166 = arith.addf %163, %165 : vector<8x1xf32>
      %c3_89 = arith.constant 3 : index
      %c0_90 = arith.constant 0 : index
      %c0_91 = arith.constant 0 : index
      %167 = vector.load %arg9[%c3_89, %c0_90, %c0_91] : memref<4x8x1xf32, #tpu.memory_space<vmem>>, vector<1x8x1xf32>
      %168 = vector.shape_cast %167 : vector<1x8x1xf32> to vector<8x1xf32>
      %169 = vector.shape_cast %166 : vector<8x1xf32> to vector<1x8x1xf32>
      tpu.vector_store %arg9[%c3_89, %c0_90, %c0_91], %169 {strides = array<i32>} : memref<4x8x1xf32, #tpu.memory_space<vmem>>, vector<1x8x1xf32>,
      %c3_92 = arith.constant 3 : index
      %c0_93 = arith.constant 0 : index
      %c0_94 = arith.constant 0 : index
      %170 = vector.load %arg10[%c3_92, %c0_93, %c0_94] : memref<4x8x64xf32, #tpu.memory_space<vmem>>, vector<1x8x64xf32>
      %171 = vector.shape_cast %170 : vector<1x8x64xf32> to vector<8x64xf32>
      %172 = vector.broadcast %157 : vector<8x1xf32> to vector<8x64xf32>
      %173 = arith.mulf %172, %171 : vector<8x64xf32>
      %cst_95 = arith.constant dense<0.000000e+00> : vector<8x64xf32>
      %174 = tpu.matmul %160, %147, %cst_95 {dimension_numbers = #tpu.dot_dimension_numbers<[1], [0], [0], [1], [0, 0, 1, 1], [], []>} : vector<8x8xf32>, vector<8x64xf32>, vector<8x64xf32> -> vector<8x64xf32>
      %175 = arith.addf %173, %174 : vector<8x64xf32>
      %c3_96 = arith.constant 3 : index
      %c0_97 = arith.constant 0 : index
      %c0_98 = arith.constant 0 : index
      %176 = vector.load %arg10[%c3_96, %c0_97, %c0_98] : memref<4x8x64xf32, #tpu.memory_space<vmem>>, vector<1x8x64xf32>
      %177 = vector.shape_cast %176 : vector<1x8x64xf32> to vector<8x64xf32>
      %178 = vector.shape_cast %175 : vector<8x64xf32> to vector<1x8x64xf32>
      tpu.vector_store %arg10[%c3_96, %c0_97, %c0_98], %178 {strides = array<i32>} : memref<4x8x64xf32, #tpu.memory_space<vmem>>, vector<1x8x64xf32>,
      %c3_99 = arith.constant 3 : index
      %c0_100 = arith.constant 0 : index
      %c0_101 = arith.constant 0 : index
      %179 = vector.load %arg8[%c3_99, %c0_100, %c0_101] : memref<4x8x1xf32, #tpu.memory_space<vmem>>, vector<1x8x1xf32>
      %180 = vector.shape_cast %179 : vector<1x8x1xf32> to vector<8x1xf32>
      %181 = vector.shape_cast %155 : vector<8x1xf32> to vector<1x8x1xf32>
      tpu.vector_store %arg8[%c3_99, %c0_100, %c0_101], %181 {strides = array<i32>} : memref<4x8x1xf32, #tpu.memory_space<vmem>>, vector<1x8x1xf32>,
    } else {
    }
    %c0_i32_2 = arith.constant 0 : i32
    %9 = arith.cmpi eq, %arg2, %c0_i32_2 : i32
    %10 = arith.extui %9 : i1 to i32
    %c0_i32_3 = arith.constant 0 : i32
    %11 = arith.cmpi ne, %10, %c0_i32_3 : i32
    scf.if %11 {
      %c0 = arith.constant 0 : index
      %c0_4 = arith.constant 0 : index
      %c0_5 = arith.constant 0 : index
      %12 = vector.load %arg9[%c0, %c0_4, %c0_5] : memref<4x8x1xf32, #tpu.memory_space<vmem>>, vector<1x8x1xf32>
      %13 = vector.shape_cast %12 : vector<1x8x1xf32> to vector<8x1xf32>
      %cst = arith.constant 0.000000e+00 : f32
      %14 = vector.broadcast %cst : f32 to vector<8x1xf32>
      %15 = arith.cmpf ogt, %13, %14 : vector<8x1xf32>
      %cst_6 = arith.constant 1.000000e+00 : f32
      %16 = vector.broadcast %cst_6 : f32 to vector<8x1xf32>
      %17 = arith.select %15, %13, %16 : vector<8x1xi1>, vector<8x1xf32>
      %c0_7 = arith.constant 0 : index
      %c0_8 = arith.constant 0 : index
      %c0_9 = arith.constant 0 : index
      %18 = vector.load %arg10[%c0_7, %c0_8, %c0_9] : memref<4x8x64xf32, #tpu.memory_space<vmem>>, vector<1x8x64xf32>
      %19 = vector.shape_cast %18 : vector<1x8x64xf32> to vector<8x64xf32>
      %20 = tpu.reciprocal %17 {approx = true} : vector<8x1xf32> -> vector<8x1xf32>
      %21 = vector.broadcast %20 : vector<8x1xf32> to vector<8x64xf32>
      %22 = arith.mulf %19, %21 : vector<8x64xf32>
      %c1 = arith.constant 1 : index
      %c0_10 = arith.constant 0 : index
      %c0_11 = arith.constant 0 : index
      %23 = vector.load %arg9[%c1, %c0_10, %c0_11] : memref<4x8x1xf32, #tpu.memory_space<vmem>>, vector<1x8x1xf32>
      %24 = vector.shape_cast %23 : vector<1x8x1xf32> to vector<8x1xf32>
      %cst_12 = arith.constant 0.000000e+00 : f32
      %25 = vector.broadcast %cst_12 : f32 to vector<8x1xf32>
      %26 = arith.cmpf ogt, %24, %25 : vector<8x1xf32>
      %cst_13 = arith.constant 1.000000e+00 : f32
      %27 = vector.broadcast %cst_13 : f32 to vector<8x1xf32>
      %28 = arith.select %26, %24, %27 : vector<8x1xi1>, vector<8x1xf32>
      %c1_14 = arith.constant 1 : index
      %c0_15 = arith.constant 0 : index
      %c0_16 = arith.constant 0 : index
      %29 = vector.load %arg10[%c1_14, %c0_15, %c0_16] : memref<4x8x64xf32, #tpu.memory_space<vmem>>, vector<1x8x64xf32>
      %30 = vector.shape_cast %29 : vector<1x8x64xf32> to vector<8x64xf32>
      %31 = tpu.reciprocal %28 {approx = true} : vector<8x1xf32> -> vector<8x1xf32>
      %32 = vector.broadcast %31 : vector<8x1xf32> to vector<8x64xf32>
      %33 = arith.mulf %30, %32 : vector<8x64xf32>
      %c2 = arith.constant 2 : index
      %c0_17 = arith.constant 0 : index
      %c0_18 = arith.constant 0 : index
      %34 = vector.load %arg9[%c2, %c0_17, %c0_18] : memref<4x8x1xf32, #tpu.memory_space<vmem>>, vector<1x8x1xf32>
      %35 = vector.shape_cast %34 : vector<1x8x1xf32> to vector<8x1xf32>
      %cst_19 = arith.constant 0.000000e+00 : f32
      %36 = vector.broadcast %cst_19 : f32 to vector<8x1xf32>
      %37 = arith.cmpf ogt, %35, %36 : vector<8x1xf32>
      %cst_20 = arith.constant 1.000000e+00 : f32
      %38 = vector.broadcast %cst_20 : f32 to vector<8x1xf32>
      %39 = arith.select %37, %35, %38 : vector<8x1xi1>, vector<8x1xf32>
      %c2_21 = arith.constant 2 : index
      %c0_22 = arith.constant 0 : index
      %c0_23 = arith.constant 0 : index
      %40 = vector.load %arg10[%c2_21, %c0_22, %c0_23] : memref<4x8x64xf32, #tpu.memory_space<vmem>>, vector<1x8x64xf32>
      %41 = vector.shape_cast %40 : vector<1x8x64xf32> to vector<8x64xf32>
      %42 = tpu.reciprocal %39 {approx = true} : vector<8x1xf32> -> vector<8x1xf32>
      %43 = vector.broadcast %42 : vector<8x1xf32> to vector<8x64xf32>
      %44 = arith.mulf %41, %43 : vector<8x64xf32>
      %c3 = arith.constant 3 : index
      %c0_24 = arith.constant 0 : index
      %c0_25 = arith.constant 0 : index
      %45 = vector.load %arg9[%c3, %c0_24, %c0_25] : memref<4x8x1xf32, #tpu.memory_space<vmem>>, vector<1x8x1xf32>
      %46 = vector.shape_cast %45 : vector<1x8x1xf32> to vector<8x1xf32>
      %cst_26 = arith.constant 0.000000e+00 : f32
      %47 = vector.broadcast %cst_26 : f32 to vector<8x1xf32>
      %48 = arith.cmpf ogt, %46, %47 : vector<8x1xf32>
      %cst_27 = arith.constant 1.000000e+00 : f32
      %49 = vector.broadcast %cst_27 : f32 to vector<8x1xf32>
      %50 = arith.select %48, %46, %49 : vector<8x1xi1>, vector<8x1xf32>
      %c3_28 = arith.constant 3 : index
      %c0_29 = arith.constant 0 : index
      %c0_30 = arith.constant 0 : index
      %51 = vector.load %arg10[%c3_28, %c0_29, %c0_30] : memref<4x8x64xf32, #tpu.memory_space<vmem>>, vector<1x8x64xf32>
      %52 = vector.shape_cast %51 : vector<1x8x64xf32> to vector<8x64xf32>
      %53 = tpu.reciprocal %50 {approx = true} : vector<8x1xf32> -> vector<8x1xf32>
      %54 = vector.broadcast %53 : vector<8x1xf32> to vector<8x64xf32>
      %55 = arith.mulf %52, %54 : vector<8x64xf32>
      %56 = tpu.concatenate %22, %33, %44, %55 in 1 : vector<8x64xf32>, vector<8x64xf32>, vector<8x64xf32>, vector<8x64xf32> -> vector<8x256xf32>
      %c0_31 = arith.constant 0 : index
      %c0_32 = arith.constant 0 : index
      %c0_33 = arith.constant 0 : index
      %57 = vector.load %arg7[%c0_31, %c0_32, %c0_33] : memref<1x8x256xf32, #tpu.memory_space<vmem>>, vector<1x8x256xf32>
      %58 = vector.shape_cast %57 : vector<1x8x256xf32> to vector<8x256xf32>
      %59 = vector.shape_cast %56 : vector<8x256xf32> to vector<1x8x256xf32>
      tpu.vector_store %arg7[%c0_31, %c0_32, %c0_33], %59 {strides = array<i32>} : memref<1x8x256xf32, #tpu.memory_space<vmem>>, vector<1x8x256xf32>,
    } else {
    }
    return
  }
  func.func @transform_0(%arg0: i32, %arg1: i32, %arg2: i32, %arg3: memref<2xi32, #tpu.memory_space<smem>>) -> (i32, i32, i32) {
    %c0_i32 = arith.constant 0 : i32
    %c0_i32_0 = arith.constant 0 : i32
    return %arg0, %arg1, %c0_i32 : i32, i32, i32
  }
  func.func @transform_1(%arg0: i32, %arg1: i32, %arg2: i32, %arg3: memref<2xi32, #tpu.memory_space<smem>>) -> (i32, i32, i32) {
    %c0_i32 = arith.constant 0 : i32
    %c0_i32_0 = arith.constant 0 : i32
    return %arg0, %arg2, %c0_i32 : i32, i32, i32
  }
  func.func @transform_2(%arg0: i32, %arg1: i32, %arg2: i32, %arg3: memref<2xi32, #tpu.memory_space<smem>>) -> (i32, i32, i32) {
    %c0_i32 = arith.constant 0 : i32
    %c0_i32_0 = arith.constant 0 : i32
    return %arg0, %arg2, %c0_i32 : i32, i32, i32
  }
  func.func @transform_3(%arg0: i32, %arg1: i32, %arg2: i32, %arg3: memref<2xi32, #tpu.memory_space<smem>>) -> (i32, i32, i32) {
    %c0_i32 = arith.constant 0 : i32
    %c0_i32_0 = arith.constant 0 : i32
    return %arg0, %arg1, %c0_i32 : i32, i32, i32
  }
}

module attributes {stable_mosaic.version = 11 : i64} {
  func.func @_out_proj_kernel(%arg0: i32, %arg1: memref<16x256xf32, #tpu.memory_space<vmem>>, %arg2: memref<256x64xf32, #tpu.memory_space<vmem>>, %arg3: memref<1x64xf32, #tpu.memory_space<vmem>>, %arg4: memref<16x1xf32, #tpu.memory_space<vmem>>, %arg5: memref<16x64xf32, #tpu.memory_space<vmem>>) attributes {dimension_semantics = [#tpu.dimension_semantics<parallel>], iteration_bounds = array<i64: 1>, scalar_prefetch = 0 : i64, scratch_operands = 0 : i64, tpu.core_type = #tpu.core_type<tc>, window_params = [{transform_indices = @transform_0, window_bounds = array<i64: 16, 256>}, {pipeline_mode = #tpu.pipeline_mode<synchronous>, transform_indices = @transform_1, window_bounds = array<i64: 256, 64>}, {pipeline_mode = #tpu.pipeline_mode<synchronous>, transform_indices = @transform_2, window_bounds = array<i64: 1, 64>}, {transform_indices = @transform_3, window_bounds = array<i64: 16, 1>}, {transform_indices = @transform_4, window_bounds = array<i64: 16, 64>}]} {
    %c0 = arith.constant 0 : index
    %c0_0 = arith.constant 0 : index
    %0 = vector.load %arg1[%c0, %c0_0] : memref<16x256xf32, #tpu.memory_space<vmem>>, vector<16x256xf32>
    %c0_1 = arith.constant 0 : index
    %c0_2 = arith.constant 0 : index
    %1 = vector.load %arg2[%c0_1, %c0_2] : memref<256x64xf32, #tpu.memory_space<vmem>>, vector<256x64xf32>
    %cst = arith.constant dense<0.000000e+00> : vector<16x64xf32>
    %2 = tpu.matmul %0, %1, %cst {dimension_numbers = #tpu.dot_dimension_numbers<[1], [0], [0], [1], [0, 0, 1, 1], [], []>} : vector<16x256xf32>, vector<256x64xf32>, vector<16x64xf32> -> vector<16x64xf32>
    %c0_3 = arith.constant 0 : index
    %c0_4 = arith.constant 0 : index
    %3 = vector.load %arg3[%c0_3, %c0_4] : memref<1x64xf32, #tpu.memory_space<vmem>>, vector<1x64xf32>
    %4 = vector.broadcast %3 : vector<1x64xf32> to vector<16x64xf32>
    %5 = arith.addf %2, %4 : vector<16x64xf32>
    %c0_5 = arith.constant 0 : index
    %c0_6 = arith.constant 0 : index
    %6 = vector.load %arg4[%c0_5, %c0_6] : memref<16x1xf32, #tpu.memory_space<vmem>>, vector<16x1xf32>
    %7 = vector.broadcast %6 : vector<16x1xf32> to vector<16x64xf32>
    %8 = arith.mulf %5, %7 : vector<16x64xf32>
    %c0_7 = arith.constant 0 : index
    %c0_8 = arith.constant 0 : index
    %9 = vector.load %arg5[%c0_7, %c0_8] : memref<16x64xf32, #tpu.memory_space<vmem>>, vector<16x64xf32>
    tpu.vector_store %arg5[%c0_7, %c0_8], %8 {strides = array<i32>} : memref<16x64xf32, #tpu.memory_space<vmem>>, vector<16x64xf32>,
    return
  }
  func.func @transform_0(%arg0: i32) -> (i32, i32) {
    %c0_i32 = arith.constant 0 : i32
    %c0_i32_0 = arith.constant 0 : i32
    return %arg0, %c0_i32 : i32, i32
  }
  func.func @transform_1(%arg0: i32) -> (i32, i32) {
    %c0_i32 = arith.constant 0 : i32
    %c0_i32_0 = arith.constant 0 : i32
    %c0_i32_1 = arith.constant 0 : i32
    return %c0_i32, %c0_i32_0 : i32, i32
  }
  func.func @transform_2(%arg0: i32) -> (i32, i32) {
    %c0_i32 = arith.constant 0 : i32
    %c0_i32_0 = arith.constant 0 : i32
    %c0_i32_1 = arith.constant 0 : i32
    return %c0_i32, %c0_i32_0 : i32, i32
  }
  func.func @transform_3(%arg0: i32) -> (i32, i32) {
    %c0_i32 = arith.constant 0 : i32
    %c0_i32_0 = arith.constant 0 : i32
    return %arg0, %c0_i32 : i32, i32
  }
  func.func @transform_4(%arg0: i32) -> (i32, i32) {
    %c0_i32 = arith.constant 0 : i32
    %c0_i32_0 = arith.constant 0 : i32
    return %arg0, %c0_i32 : i32, i32
  }
}

</mosaic_0001>

<llo_original>
// kernel: attention_forward.5
$region0: #{attention_forward.5}
  #allocation0 [shape = 'u32[]', space=smem, size = 0x4, offset = 0x4, fixed_abs, tag = 'smem constant byte address 0x4 - core index']
  #allocation1 [shape = 'u32[144,128]{1,0:T(1,128)}', space=vmem, size = 0x12000, scoped, tag = 'internal scratch']
  %s0 = inlined_call_operand.vmem [shape: f32[16,256], index: 0, kind: input, shape index: {}]
  %s1 = inlined_call_operand.vmem [shape: f32[256,64], index: 1, kind: input, shape index: {}]
  %s2 = inlined_call_operand.vmem [shape: f32[1,64], index: 2, kind: input, shape index: {}]
  %s3 = inlined_call_operand.vmem [shape: f32[16,1], index: 3, kind: input, shape index: {}]
  %s4 = inlined_call_operand.hbm [shape: f32[16,64], index: 4, kind: output, shape index: {}]
  %s5 = sld [smem:[#allocation0]]
  $region26: #{attention_forward.5} parent=0
    _
  %s7 = ssub.s32 1, %s5
  %s8 = scalar_select 0, %s7, %s5
  $region1: #{attention_forward.5} parent=0
    #allocation2 [shape = 'u8[8192]{0}', space=vmem, size = 0x2000, scoped, tag = 'output window, operand 0, single buffered']
    #allocation3 [shape = 's32[1]{0}', space=sflag, size = 0x4, scoped, tag = 'scoped memory for attention_forward.5']
    %9 = vsyncpa [#allocation3], 0
    // Predicated region
    $region2: #{attention_forward.5} parent=1 // pred_check
      _
    $region3: #{attention_forward.5} parent=1 // pred_check_branch
      %11 = sbr.rel (0) target = $region5
    $region4: #{attention_forward.5} parent=1 // pred_region
      _
    $region5: #{attention_forward.5} parent=1 // pred_fallthru
      _
    // Predicated region
    $region6: #{attention_forward.5} parent=1 // pred_check
      _
    $region7: #{attention_forward.5} parent=1 // pred_check_branch
      %13 = sbr.rel (0) target = $region9
    $region8: #{attention_forward.5} parent=1 // pred_region
      _
    $region9: #{attention_forward.5} parent=1 // pred_fallthru
      _
    // Predicated region
    $region10: #{attention_forward.5} parent=1 // pred_check
      _
    $region11: #{attention_forward.5} parent=1 // pred_check_branch
      %15 = sbr.rel (0) target = $region13
    $region12: #{attention_forward.5} parent=1 // pred_region
      _
    $region13: #{attention_forward.5} parent=1 // pred_fallthru
      _
    // Predicated region
    $region14: #{attention_forward.5} parent=1 // pred_check
      _
    $region15: #{attention_forward.5} parent=1 // pred_check_branch
      %17 = sbr.rel (0) target = $region17
    $region16: #{attention_forward.5} parent=1 // pred_region
      _
    $region17: #{attention_forward.5} parent=1 // pred_fallthru
      _
    %v18 = vld [vmem:[%s0] sm:$0xff]
    %v19 = vld [vmem:[%s0 + $0x8] sm:$0xff]
    %v20 = vld [vmem:[%s0 + $0x10] sm:$0xff]
    %v21 = vld [vmem:[%s0 + $0x18] sm:$0xff]
    %v22 = vld [vmem:[%s1] sm:$0xff]
    %v23 = vld [vmem:[%s1 + $0x8] sm:$0xff]
    %v24 = vld [vmem:[%s1 + $0x10] sm:$0xff]
    %v25 = vld [vmem:[%s1 + $0x18] sm:$0xff]
    %v26 = vld [vmem:[%s1 + $0x20] sm:$0xff]
    %v27 = vld [vmem:[%s1 + $0x28] sm:$0xff]
    %v28 = vld [vmem:[%s1 + $0x30] sm:$0xff]
    %v29 = vld [vmem:[%s1 + $0x38] sm:$0xff]
    %v30 = vld [vmem:[%s1 + $0x40] sm:$0xff]
    %v31 = vld [vmem:[%s1 + $0x48] sm:$0xff]
    %v32 = vld [vmem:[%s1 + $0x50] sm:$0xff]
    %v33 = vld [vmem:[%s1 + $0x58] sm:$0xff]
    %v34 = vld [vmem:[%s1 + $0x60] sm:$0xff]
    %v35 = vld [vmem:[%s1 + $0x68] sm:$0xff]
    %v36 = vld [vmem:[%s1 + $0x70] sm:$0xff]
    %v37 = vld [vmem:[%s1 + $0x78] sm:$0xff]
    %v38 = vld [vmem:[%s1 + $0x80] sm:$0xff]
    %v39 = vld [vmem:[%s1 + $0x88] sm:$0xff]
    %v40 = vld [vmem:[%s1 + $0x90] sm:$0xff]
    %v41 = vld [vmem:[%s1 + $0x98] sm:$0xff]
    %v42 = vld [vmem:[%s1 + $0xa0] sm:$0xff]
    %v43 = vld [vmem:[%s1 + $0xa8] sm:$0xff]
    %v44 = vld [vmem:[%s1 + $0xb0] sm:$0xff]
    %v45 = vld [vmem:[%s1 + $0xb8] sm:$0xff]
    %v46 = vld [vmem:[%s1 + $0xc0] sm:$0xff]
    %v47 = vld [vmem:[%s1 + $0xc8] sm:$0xff]
    %v48 = vld [vmem:[%s1 + $0xd0] sm:$0xff]
    %v49 = vld [vmem:[%s1 + $0xd8] sm:$0xff]
    %v50 = vld [vmem:[%s1 + $0xe0] sm:$0xff]
    %v51 = vld [vmem:[%s1 + $0xe8] sm:$0xff]
    %v52 = vld [vmem:[%s1 + $0xf0] sm:$0xff]
    %v53 = vld [vmem:[%s1 + $0xf8] sm:$0xff]
    %v54 = vld [vmem:[%s2] sm:$0x1]
    %v56 = vlaneseq
    %v57 = vshrl.u32 %v56, 7
    %v58 = vsub.s32 0, %v57
    %v59 = vrot.slane %v54, %v58
    %61 = vmatprep.subr.mxu0 0.0
    %62 = vmatpush1.msra.mxu0 %v37
    %63 = vmatprep.subr.mxu0 0.0
    %64 = vmatpush1.msra.mxu0 %v36
    %65 = vmatprep.subr.mxu0 0.0
    %66 = vmatpush1.msra.mxu0 %v35
    %67 = vmatprep.subr.mxu0 0.0
    %68 = vmatpush1.msra.mxu0 %v34
    %69 = vmatprep.subr.mxu0 0.0
    %70 = vmatpush1.msra.mxu0 %v33
    %71 = vmatprep.subr.mxu0 0.0
    %72 = vmatpush1.msra.mxu0 %v32
    %73 = vmatprep.subr.mxu0 0.0
    %74 = vmatpush1.msra.mxu0 %v31
    %75 = vmatprep.subr.mxu0 0.0
    %76 = vmatpush1.msra.mxu0 %v30
    %77 = vmatprep.subr.mxu0 0.0
    %78 = vmatpush1.msra.mxu0 %v29
    %79 = vmatprep.subr.mxu0 0.0
    %80 = vmatpush1.msra.mxu0 %v28
    %81 = vmatprep.subr.mxu0 0.0
    %82 = vmatpush1.msra.mxu0 %v27
    %83 = vmatprep.subr.mxu0 0.0
    %84 = vmatpush1.msra.mxu0 %v26
    %85 = vmatprep.subr.mxu0 0.0
    %86 = vmatpush1.msra.mxu0 %v25
    %87 = vmatprep.subr.mxu0 0.0
    %88 = vmatpush1.msra.mxu0 %v24
    %89 = vmatprep.subr.mxu0 0.0
    %90 = vmatpush1.msra.mxu0 %v23
    %91 = vmatprep.subr.mxu0 0.0
    %92 = vmatpush1.msra.mxu0 %v22
    %93 = vmatprep.subr.mxu0 0.0
    %94 = vmatpush2.msra.mxu0 %v53
    %95 = vmatprep.subr.mxu0 0.0
    %96 = vmatpush2.msra.mxu0 %v52
    %97 = vmatprep.subr.mxu0 0.0
    %98 = vmatpush2.msra.mxu0 %v51
    %99 = vmatprep.subr.mxu0 0.0
    %100 = vmatpush2.msra.mxu0 %v50
    %101 = vmatprep.subr.mxu0 0.0
    %102 = vmatpush2.msra.mxu0 %v49
    %103 = vmatprep.subr.mxu0 0.0
    %104 = vmatpush2.msra.mxu0 %v48
    %105 = vmatprep.subr.mxu0 0.0
    %106 = vmatpush2.msra.mxu0 %v47
    %107 = vmatprep.subr.mxu0 0.0
    %108 = vmatpush2.msra.mxu0 %v46
    %109 = vmatprep.subr.mxu0 0.0
    %110 = vmatpush2.msra.mxu0 %v45
    %111 = vmatprep.subr.mxu0 0.0
    %112 = vmatpush2.msra.mxu0 %v44
    %113 = vmatprep.subr.mxu0 0.0
    %114 = vmatpush2.msra.mxu0 %v43
    %115 = vmatprep.subr.mxu0 0.0
    %116 = vmatpush2.msra.mxu0 %v42
    %117 = vmatprep.subr.mxu0 0.0
    %118 = vmatpush2.msra.mxu0 %v41
    %119 = vmatprep.subr.mxu0 0.0
    %120 = vmatpush2.msra.mxu0 %v40
    %121 = vmatprep.subr.mxu0 0.0
    %122 = vmatpush2.msra.mxu0 %v39
    %123 = vmatprep.subr.mxu0 0.0
    %124 = vmatpush2.msra.mxu0 %v38
    %125 = vmatprep.mubr.f32.mxu0 %v19
    %126 = vmatmul.mubr.f32.gmra.mxu0 %v18
    %v127 = vpop.f32.mrf.mxu0
    %v128 = vadd.f32 %v59, %v127
    %v129 = vpop.f32.mrf.mxu0
    %130 = vmatprep.mubr.f32.mxu0 %v21
    %131 = vmatmul.mubr.f32.gmra.mxu0 %v20
    %v132 = vpop.f32.mrf.mxu0
    %v133 = vadd.f32 %v59, %v132
    %v134 = vpop.f32.mrf.mxu0
    %135 = vdwg.mxu0
    %v136 = vld [vmem:[%s3] sm:$0xff]
    %v137 = vld [vmem:[%s3 + $0x8] sm:$0xff]
    %139 = vset.pattern.permute.xlu0 0
    %140 = vperm.xlu0 %139, %v136
    %v141 = vpop.permute.xlu0 %140
    %144 = vset.pattern.permute.xlu0 0
    %145 = vperm.xlu0 %144, %v137
    %v146 = vpop.permute.xlu0 %145
    %v148 = vmul.f32 %v128, %v141
    %v149 = vmul.f32 %v133, %v146
    %vm150 = vcmask 523264
    %151 = vst.msk [vmem:[#allocation2] sm:$0xff] %vm150, %v148
    %152 = vst.msk [vmem:[#allocation2 + $0x8] sm:$0xff] %vm150, %v149
    // Predicated region
    $region18: #{attention_forward.5} parent=1 // pred_check
      _
    $region19: #{attention_forward.5} parent=1 // pred_check_branch
      %154 = sbr.rel (0) target = $region21
    $region20: #{attention_forward.5} parent=1 // pred_region
      %s156 = ssub.s32 256, 256
      %157 = vsyncadd [#allocation3], %s156
      %s158 = sshll.u32 [#allocation2], 4
      %s159 = int_to_ptr.vmem [resolvable:$true] %s158
      %164 = dma.vmem_to_hbm [thread:$0]  %s159, 256, %s4, [#allocation3], 128, 128, 8
    $region21: #{attention_forward.5} parent=1 // pred_fallthru
      _
    // Predicated region
    $region22: #{attention_forward.5} parent=1 // pred_check
      _
    $region23: #{attention_forward.5} parent=1 // pred_check_branch
      %166 = sbr.rel (0) target = $region25
    $region24: #{attention_forward.5} parent=1 // pred_region
      %167 = dma.done [#allocation3], 256
    $region25: #{attention_forward.5} parent=1 // pred_fallthru
      _
    %168 = vsyncpa [#allocation3], 1

// kernel: attention_forward.3
$region0: #{attention_forward.3}
  #allocation0 [shape = 'u32[]', space=smem, size = 0x4, offset = 0x4, fixed_abs, tag = 'smem constant byte address 0x4 - core index']
  #allocation1 [shape = 'u32[144,128]{1,0:T(1,128)}', space=vmem, size = 0x12000, scoped, tag = 'internal scratch']
  %s0 = inlined_call_operand.vmem [shape: f32[16,64], index: 0, kind: input, shape index: {}]
  %s1 = inlined_call_operand.vmem [shape: f32[64,768], index: 1, kind: input, shape index: {}]
  %s2 = inlined_call_operand.vmem [shape: f32[1,768], index: 2, kind: input, shape index: {}]
  %s3 = inlined_call_operand.vmem [shape: f32[16,128], index: 3, kind: input, shape index: {}]
  %s4 = inlined_call_operand.vmem [shape: f32[16,128], index: 4, kind: input, shape index: {}]
  %s5 = inlined_call_operand.vmem [shape: f32[16,256], index: 5, kind: output, shape index: {0}]
  %s6 = inlined_call_operand.vmem [shape: f32[16,256], index: 6, kind: output, shape index: {1}]
  %s7 = inlined_call_operand.vmem [shape: f32[16,256], index: 7, kind: output, shape index: {2}]
  %8 = xla_tuple %s5, %s6, %s7
  %s9 = sld [smem:[#allocation0]]
  $region46: #{attention_forward.3} parent=0
    _
  %s11 = ssub.s32 1, %s9
  %s12 = scalar_select 0, %s11, %s9
  // Predicated region
  $region2: #{attention_forward.3} parent=0 // pred_check
    _
  $region3: #{attention_forward.3} parent=0 // pred_check_branch
    %14 = sbr.rel (0) target = $region5
  $region4: #{attention_forward.3} parent=0 // pred_region
    _
  $region5: #{attention_forward.3} parent=0 // pred_fallthru
    _
  // Predicated region
  $region6: #{attention_forward.3} parent=0 // pred_check
    _
  $region7: #{attention_forward.3} parent=0 // pred_check_branch
    %16 = sbr.rel (0) target = $region9
  $region8: #{attention_forward.3} parent=0 // pred_region
    _
  $region9: #{attention_forward.3} parent=0 // pred_fallthru
    _
  // Predicated region
  $region10: #{attention_forward.3} parent=0 // pred_check
    _
  $region11: #{attention_forward.3} parent=0 // pred_check_branch
    %18 = sbr.rel (0) target = $region13
  $region12: #{attention_forward.3} parent=0 // pred_region
    _
  $region13: #{attention_forward.3} parent=0 // pred_fallthru
    _
  // Predicated region
  $region14: #{attention_forward.3} parent=0 // pred_check
    _
  $region15: #{attention_forward.3} parent=0 // pred_check_branch
    %20 = sbr.rel (0) target = $region17
  $region16: #{attention_forward.3} parent=0 // pred_region
    _
  $region17: #{attention_forward.3} parent=0 // pred_fallthru
    _
  // Predicated region
  $region18: #{attention_forward.3} parent=0 // pred_check
    _
  $region19: #{attention_forward.3} parent=0 // pred_check_branch
    %22 = sbr.rel (0) target = $region21
  $region20: #{attention_forward.3} parent=0 // pred_region
    _
  $region21: #{attention_forward.3} parent=0 // pred_fallthru
    _
  %v23 = vld [vmem:[%s0] sm:$0xff]
  %v24 = vld [vmem:[%s0 + $0x8] sm:$0xff]
  %v25 = vld [vmem:[%s1] sm:$0xff]
  %v26 = vld [vmem:[%s1 + $0x8] sm:$0xff]
  %v27 = vld [vmem:[%s1 + $0x10] sm:$0xff]
  %v28 = vld [vmem:[%s1 + $0x18] sm:$0xff]
  %v29 = vld [vmem:[%s1 + $0x20] sm:$0xff]
  %v30 = vld [vmem:[%s1 + $0x28] sm:$0xff]
  %v31 = vld [vmem:[%s1 + $0x30] sm:$0xff]
  %v32 = vld [vmem:[%s1 + $0x38] sm:$0xff]
  %v33 = vld [vmem:[%s1 + $0x40] sm:$0xff]
  %v34 = vld [vmem:[%s1 + $0x48] sm:$0xff]
  %v35 = vld [vmem:[%s1 + $0x50] sm:$0xff]
  %v36 = vld [vmem:[%s1 + $0x58] sm:$0xff]
  %v37 = vld [vmem:[%s1 + $0x60] sm:$0xff]
  %v38 = vld [vmem:[%s1 + $0x68] sm:$0xff]
  %v39 = vld [vmem:[%s1 + $0x70] sm:$0xff]
  %v40 = vld [vmem:[%s1 + $0x78] sm:$0xff]
  %v41 = vld [vmem:[%s1 + $0x80] sm:$0xff]
  %v42 = vld [vmem:[%s1 + $0x88] sm:$0xff]
  %v43 = vld [vmem:[%s1 + $0x90] sm:$0xff]
  %v44 = vld [vmem:[%s1 + $0x98] sm:$0xff]
  %v45 = vld [vmem:[%s1 + $0xa0] sm:$0xff]
  %v46 = vld [vmem:[%s1 + $0xa8] sm:$0xff]
  %v47 = vld [vmem:[%s1 + $0xb0] sm:$0xff]
  %v48 = vld [vmem:[%s1 + $0xb8] sm:$0xff]
  %v49 = vld [vmem:[%s1 + $0xc0] sm:$0xff]
  %v50 = vld [vmem:[%s1 + $0xc8] sm:$0xff]
  %v51 = vld [vmem:[%s1 + $0xd0] sm:$0xff]
  %v52 = vld [vmem:[%s1 + $0xd8] sm:$0xff]
  %v53 = vld [vmem:[%s1 + $0xe0] sm:$0xff]
  %v54 = vld [vmem:[%s1 + $0xe8] sm:$0xff]
  %v55 = vld [vmem:[%s1 + $0xf0] sm:$0xff]
  %v56 = vld [vmem:[%s1 + $0xf8] sm:$0xff]
  %v57 = vld [vmem:[%s1 + $0x100] sm:$0xff]
  %v58 = vld [vmem:[%s1 + $0x108] sm:$0xff]
  %v59 = vld [vmem:[%s1 + $0x110] sm:$0xff]
  %v60 = vld [vmem:[%s1 + $0x118] sm:$0xff]
  %v61 = vld [vmem:[%s1 + $0x120] sm:$0xff]
  %v62 = vld [vmem:[%s1 + $0x128] sm:$0xff]
  %v63 = vld [vmem:[%s1 + $0x130] sm:$0xff]
  %v64 = vld [vmem:[%s1 + $0x138] sm:$0xff]
  %v65 = vld [vmem:[%s1 + $0x140] sm:$0xff]
  %v66 = vld [vmem:[%s1 + $0x148] sm:$0xff]
  %v67 = vld [vmem:[%s1 + $0x150] sm:$0xff]
  %v68 = vld [vmem:[%s1 + $0x158] sm:$0xff]
  %v69 = vld [vmem:[%s1 + $0x160] sm:$0xff]
  %v70 = vld [vmem:[%s1 + $0x168] sm:$0xff]
  %v71 = vld [vmem:[%s1 + $0x170] sm:$0xff]
  %v72 = vld [vmem:[%s1 + $0x178] sm:$0xff]
  %v73 = vld [vmem:[%s2] sm:$0x3f]
  %v75 = vlaneseq
  %v76 = vshrl.u32 %v75, 7
  %v77 = vsub.s32 0, %v76
  %v78 = vrot.slane %v73, %v77
  %v79 = vlaneseq
  %v80 = vshrl.u32 %v79, 7
  %v81 = vsub.s32 1, %v80
  %v82 = vrot.slane %v73, %v81
  %v83 = vlaneseq
  %v84 = vshrl.u32 %v83, 7
  %v85 = vsub.s32 2, %v84
  %v86 = vrot.slane %v73, %v85
  %v87 = vlaneseq
  %v88 = vshrl.u32 %v87, 7
  %v89 = vsub.s32 3, %v88
  %v90 = vrot.slane %v73, %v89
  %v91 = vlaneseq
  %v92 = vshrl.u32 %v91, 7
  %v93 = vsub.s32 4, %v92
  %v94 = vrot.slane %v73, %v93
  %v95 = vlaneseq
  %v96 = vshrl.u32 %v95, 7
  %v97 = vsub.s32 5, %v96
  %v98 = vrot.slane %v73, %v97
  %vm105 = vcmask 523264
  %v107 = vsel %vm105, %v23, 0
  %v110 = vsel %vm105, %v24, 0
  %112 = vmatprep.subr.mxu0 0.0
  %113 = vmatpush1.msra.mxu0 0.0
  %114 = vmatprep.subr.mxu0 0.0
  %115 = vmatpush1.msra.mxu0 0.0
  %116 = vmatprep.subr.mxu0 0.0
  %117 = vmatpush1.msra.mxu0 0.0
  %118 = vmatprep.subr.mxu0 0.0
  %119 = vmatpush1.msra.mxu0 0.0
  %120 = vmatprep.subr.mxu0 0.0
  %121 = vmatpush1.msra.mxu0 0.0
  %122 = vmatprep.subr.mxu0 0.0
  %123 = vmatpush1.msra.mxu0 0.0
  %124 = vmatprep.subr.mxu0 0.0
  %125 = vmatpush1.msra.mxu0 0.0
  %126 = vmatprep.subr.mxu0 0.0
  %127 = vmatpush1.msra.mxu0 0.0
  %128 = vmatprep.subr.mxu0 %v68
  %129 = vmatpush1.msra.mxu0 %v67
  %130 = vmatprep.subr.mxu0 %v62
  %131 = vmatpush1.msra.mxu0 %v61
  %132 = vmatprep.subr.mxu0 %v56
  %133 = vmatpush1.msra.mxu0 %v55
  %134 = vmatprep.subr.mxu0 %v50
  %135 = vmatpush1.msra.mxu0 %v49
  %136 = vmatprep.subr.mxu0 %v44
  %137 = vmatpush1.msra.mxu0 %v43
  %138 = vmatprep.subr.mxu0 %v38
  %139 = vmatpush1.msra.mxu0 %v37
  %140 = vmatprep.subr.mxu0 %v32
  %141 = vmatpush1.msra.mxu0 %v31
  %142 = vmatprep.subr.mxu0 %v26
  %143 = vmatpush1.msra.mxu0 %v25
  %144 = vmatprep.subr.mxu0 0.0
  %145 = vmatpush2.msra.mxu0 0.0
  %146 = vmatprep.subr.mxu0 0.0
  %147 = vmatpush2.msra.mxu0 0.0
  %148 = vmatprep.subr.mxu0 0.0
  %149 = vmatpush2.msra.mxu0 0.0
  %150 = vmatprep.subr.mxu0 0.0
  %151 = vmatpush2.msra.mxu0 0.0
  %152 = vmatprep.subr.mxu0 0.0
  %153 = vmatpush2.msra.mxu0 0.0
  %154 = vmatprep.subr.mxu0 0.0
  %155 = vmatpush2.msra.mxu0 0.0
  %156 = vmatprep.subr.mxu0 0.0
  %157 = vmatpush2.msra.mxu0 0.0
  %158 = vmatprep.subr.mxu0 0.0
  %159 = vmatpush2.msra.mxu0 0.0
  %160 = vmatprep.subr.mxu0 0.0
  %161 = vmatpush2.msra.mxu0 0.0
  %162 = vmatprep.subr.mxu0 0.0
  %163 = vmatpush2.msra.mxu0 0.0
  %164 = vmatprep.subr.mxu0 0.0
  %165 = vmatpush2.msra.mxu0 0.0
  %166 = vmatprep.subr.mxu0 0.0
  %167 = vmatpush2.msra.mxu0 0.0
  %168 = vmatprep.subr.mxu0 0.0
  %169 = vmatpush2.msra.mxu0 0.0
  %170 = vmatprep.subr.mxu0 0.0
  %171 = vmatpush2.msra.mxu0 0.0
  %172 = vmatprep.subr.mxu0 0.0
  %173 = vmatpush2.msra.mxu0 0.0
  %174 = vmatprep.subr.mxu0 0.0
  %175 = vmatpush2.msra.mxu0 0.0
  %176 = vmatprep.mubr.f32.mxu0 0.0
  %177 = vmatmul.mubr.f32.gmra.mxu0 %v107
  %v178 = vpop.f32.mrf.mxu0
  %v179 = vadd.f32 %v78, %v178
  %v180 = vpop.f32.mrf.mxu0
  %v181 = vadd.f32 %v82, %v180
  %182 = vmatprep.mubr.f32.mxu0 0.0
  %183 = vmatmul.mubr.f32.gmra.mxu0 %v110
  %v184 = vpop.f32.mrf.mxu0
  %v185 = vadd.f32 %v78, %v184
  %v186 = vpop.f32.mrf.mxu0
  %v187 = vadd.f32 %v82, %v186
  %188 = vdwg.mxu0
  %189 = vmatprep.subr.mxu0 0.0
  %190 = vmatpush1.msra.mxu0 0.0
  %191 = vmatprep.subr.mxu0 0.0
  %192 = vmatpush1.msra.mxu0 0.0
  %193 = vmatprep.subr.mxu0 0.0
  %194 = vmatpush1.msra.mxu0 0.0
  %195 = vmatprep.subr.mxu0 0.0
  %196 = vmatpush1.msra.mxu0 0.0
  %197 = vmatprep.subr.mxu0 0.0
  %198 = vmatpush1.msra.mxu0 0.0
  %199 = vmatprep.subr.mxu0 0.0
  %200 = vmatpush1.msra.mxu0 0.0
  %201 = vmatprep.subr.mxu0 0.0
  %202 = vmatpush1.msra.mxu0 0.0
  %203 = vmatprep.subr.mxu0 0.0
  %204 = vmatpush1.msra.mxu0 0.0
  %205 = vmatprep.subr.mxu0 %v70
  %206 = vmatpush1.msra.mxu0 %v69
  %207 = vmatprep.subr.mxu0 %v64
  %208 = vmatpush1.msra.mxu0 %v63
  %209 = vmatprep.subr.mxu0 %v58
  %210 = vmatpush1.msra.mxu0 %v57
  %211 = vmatprep.subr.mxu0 %v52
  %212 = vmatpush1.msra.mxu0 %v51
  %213 = vmatprep.subr.mxu0 %v46
  %214 = vmatpush1.msra.mxu0 %v45
  %215 = vmatprep.subr.mxu0 %v40
  %216 = vmatpush1.msra.mxu0 %v39
  %217 = vmatprep.subr.mxu0 %v34
  %218 = vmatpush1.msra.mxu0 %v33
  %219 = vmatprep.subr.mxu0 %v28
  %220 = vmatpush1.msra.mxu0 %v27
  %221 = vmatprep.subr.mxu0 0.0
  %222 = vmatpush2.msra.mxu0 0.0
  %223 = vmatprep.subr.mxu0 0.0
  %224 = vmatpush2.msra.mxu0 0.0
  %225 = vmatprep.subr.mxu0 0.0
  %226 = vmatpush2.msra.mxu0 0.0
  %227 = vmatprep.subr.mxu0 0.0
  %228 = vmatpush2.msra.mxu0 0.0
  %229 = vmatprep.subr.mxu0 0.0
  %230 = vmatpush2.msra.mxu0 0.0
  %231 = vmatprep.subr.mxu0 0.0
  %232 = vmatpush2.msra.mxu0 0.0
  %233 = vmatprep.subr.mxu0 0.0
  %234 = vmatpush2.msra.mxu0 0.0
  %235 = vmatprep.subr.mxu0 0.0
  %236 = vmatpush2.msra.mxu0 0.0
  %237 = vmatprep.subr.mxu0 0.0
  %238 = vmatpush2.msra.mxu0 0.0
  %239 = vmatprep.subr.mxu0 0.0
  %240 = vmatpush2.msra.mxu0 0.0
  %241 = vmatprep.subr.mxu0 0.0
  %242 = vmatpush2.msra.mxu0 0.0
  %243 = vmatprep.subr.mxu0 0.0
  %244 = vmatpush2.msra.mxu0 0.0
  %245 = vmatprep.subr.mxu0 0.0
  %246 = vmatpush2.msra.mxu0 0.0
  %247 = vmatprep.subr.mxu0 0.0
  %248 = vmatpush2.msra.mxu0 0.0
  %249 = vmatprep.subr.mxu0 0.0
  %250 = vmatpush2.msra.mxu0 0.0
  %251 = vmatprep.subr.mxu0 0.0
  %252 = vmatpush2.msra.mxu0 0.0
  %253 = vmatprep.mubr.f32.mxu0 0.0
  %254 = vmatmul.mubr.f32.gmra.mxu0 %v107
  %v255 = vpop.f32.mrf.mxu0
  %v256 = vadd.f32 %v86, %v255
  %v257 = vpop.f32.mrf.mxu0
  %v258 = vadd.f32 %v90, %v257
  %259 = vmatprep.mubr.f32.mxu0 0.0
  %260 = vmatmul.mubr.f32.gmra.mxu0 %v110
  %v261 = vpop.f32.mrf.mxu0
  %v262 = vadd.f32 %v86, %v261
  %v263 = vpop.f32.mrf.mxu0
  %v264 = vadd.f32 %v90, %v263
  %265 = vdwg.mxu0
  %266 = vmatprep.subr.mxu0 0.0
  %267 = vmatpush1.msra.mxu0 0.0
  %268 = vmatprep.subr.mxu0 0.0
  %269 = vmatpush1.msra.mxu0 0.0
  %270 = vmatprep.subr.mxu0 0.0
  %271 = vmatpush1.msra.mxu0 0.0
  %272 = vmatprep.subr.mxu0 0.0
  %273 = vmatpush1.msra.mxu0 0.0
  %274 = vmatprep.subr.mxu0 0.0
  %275 = vmatpush1.msra.mxu0 0.0
  %276 = vmatprep.subr.mxu0 0.0
  %277 = vmatpush1.msra.mxu0 0.0
  %278 = vmatprep.subr.mxu0 0.0
  %279 = vmatpush1.msra.mxu0 0.0
  %280 = vmatprep.subr.mxu0 0.0
  %281 = vmatpush1.msra.mxu0 0.0
  %282 = vmatprep.subr.mxu0 %v72
  %283 = vmatpush1.msra.mxu0 %v71
  %284 = vmatprep.subr.mxu0 %v66
  %285 = vmatpush1.msra.mxu0 %v65
  %286 = vmatprep.subr.mxu0 %v60
  %287 = vmatpush1.msra.mxu0 %v59
  %288 = vmatprep.subr.mxu0 %v54
  %289 = vmatpush1.msra.mxu0 %v53
  %290 = vmatprep.subr.mxu0 %v48
  %291 = vmatpush1.msra.mxu0 %v47
  %292 = vmatprep.subr.mxu0 %v42
  %293 = vmatpush1.msra.mxu0 %v41
  %294 = vmatprep.subr.mxu0 %v36
  %295 = vmatpush1.msra.mxu0 %v35
  %296 = vmatprep.subr.mxu0 %v30
  %297 = vmatpush1.msra.mxu0 %v29
  %298 = vmatprep.subr.mxu0 0.0
  %299 = vmatpush2.msra.mxu0 0.0
  %300 = vmatprep.subr.mxu0 0.0
  %301 = vmatpush2.msra.mxu0 0.0
  %302 = vmatprep.subr.mxu0 0.0
  %303 = vmatpush2.msra.mxu0 0.0
  %304 = vmatprep.subr.mxu0 0.0
  %305 = vmatpush2.msra.mxu0 0.0
  %306 = vmatprep.subr.mxu0 0.0
  %307 = vmatpush2.msra.mxu0 0.0
  %308 = vmatprep.subr.mxu0 0.0
  %309 = vmatpush2.msra.mxu0 0.0
  %310 = vmatprep.subr.mxu0 0.0
  %311 = vmatpush2.msra.mxu0 0.0
  %312 = vmatprep.subr.mxu0 0.0
  %313 = vmatpush2.msra.mxu0 0.0
  %314 = vmatprep.subr.mxu0 0.0
  %315 = vmatpush2.msra.mxu0 0.0
  %316 = vmatprep.subr.mxu0 0.0
  %317 = vmatpush2.msra.mxu0 0.0
  %318 = vmatprep.subr.mxu0 0.0
  %319 = vmatpush2.msra.mxu0 0.0
  %320 = vmatprep.subr.mxu0 0.0
  %321 = vmatpush2.msra.mxu0 0.0
  %322 = vmatprep.subr.mxu0 0.0
  %323 = vmatpush2.msra.mxu0 0.0
  %324 = vmatprep.subr.mxu0 0.0
  %325 = vmatpush2.msra.mxu0 0.0
  %326 = vmatprep.subr.mxu0 0.0
  %327 = vmatpush2.msra.mxu0 0.0
  %328 = vmatprep.subr.mxu0 0.0
  %329 = vmatpush2.msra.mxu0 0.0
  %330 = vmatprep.mubr.f32.mxu0 0.0
  %331 = vmatmul.mubr.f32.gmra.mxu0 %v107
  %v332 = vpop.f32.mrf.mxu0
  %v333 = vadd.f32 %v94, %v332
  %v334 = vpop.f32.mrf.mxu0
  %v335 = vadd.f32 %v98, %v334
  %336 = vmatprep.mubr.f32.mxu0 0.0
  %337 = vmatmul.mubr.f32.gmra.mxu0 %v110
  %v338 = vpop.f32.mrf.mxu0
  %v339 = vadd.f32 %v94, %v338
  %v340 = vpop.f32.mrf.mxu0
  %v341 = vadd.f32 %v98, %v340
  %342 = vdwg.mxu0
  %v343 = vld [vmem:[%s3] sm:$0xff]
  %v344 = vld [vmem:[%s3 + $0x8] sm:$0xff]
  %v345 = vld [vmem:[%s4] sm:$0xff]
  %v346 = vld [vmem:[%s4 + $0x8] sm:$0xff]
  %v347 = vlaneseq
  %v348 = vand.u32 %v347, 127
  %vm349 = vcmp.lt.s32.totalorder %v348, 0
  %v350 = vsub.s32 0, %v348
  %v351 = vsel %vm349, %v350, %v348
  %v352 = vshrl.u32 %v351, 1
  %v353 = vand.u32 %v351, 1
  %v354 = vsub.s32 0, %v353
  %v355 = vsel %vm349, %v354, %v353
  %vm356 = vcmp.ne.s32.totalorder %v355, 0
  %vm357 = vcmp.lt.s32.totalorder %v355, 0
  %vm358 = vmand %vm357, %vm356
  %v359 = vadd.s32 %v355, 2
  %v360 = vsel %vm358, %v359, %v355
  %vm361 = vcmp.eq.s32.totalorder %v360, 0
  %364 = vrot.lane.b32.xlu0 %v179, 127
  %v365 = vpop.permute.xlu0 %364
  %366 = vrot.lane.b32.xlu0 %v185, 127
  %v367 = vpop.permute.xlu0 %366
  %370 = vrot.lane.b32.xlu0 %v179, 1
  %v371 = vpop.permute.xlu0 %370
  %372 = vrot.lane.b32.xlu0 %v185, 1
  %v373 = vpop.permute.xlu0 %372
  %v376 = vsub.f32 0.0, %v365
  %v377 = vsub.f32 0.0, %v367
  %v378 = vsel %vm361, %v376, %v371
  %v379 = vsel %vm361, %v377, %v373
  %v380 = vmul.f32 %v179, %v343
  %v381 = vmul.f32 %v185, %v344
  %v382 = vmul.f32 %v378, %v345
  %v383 = vmul.f32 %v379, %v346
  %v384 = vadd.f32 %v380, %v382
  %v385 = vadd.f32 %v381, %v383
  %386 = vst [vmem:[%s5] sm:$0xff] %v384
  %387 = vst [vmem:[%s5 + $0x10] sm:$0xff] %v385
  %390 = vrot.lane.b32.xlu0 %v256, 127
  %v391 = vpop.permute.xlu0 %390
  %392 = vrot.lane.b32.xlu0 %v262, 127
  %v393 = vpop.permute.xlu0 %392
  %396 = vrot.lane.b32.xlu0 %v256, 1
  %v397 = vpop.permute.xlu0 %396
  %398 = vrot.lane.b32.xlu0 %v262, 1
  %v399 = vpop.permute.xlu0 %398
  %v402 = vsub.f32 0.0, %v391
  %v403 = vsub.f32 0.0, %v393
  %v404 = vsel %vm361, %v402, %v397
  %v405 = vsel %vm361, %v403, %v399
  %v406 = vmul.f32 %v256, %v343
  %v407 = vmul.f32 %v262, %v344
  %v408 = vmul.f32 %v404, %v345
  %v409 = vmul.f32 %v405, %v346
  %v410 = vadd.f32 %v406, %v408
  %v411 = vadd.f32 %v407, %v409
  %412 = vst [vmem:[%s6] sm:$0xff] %v410
  %413 = vst [vmem:[%s6 + $0x10] sm:$0xff] %v411
  %414 = vst [vmem:[%s5 + $0x8] sm:$0xff] %v181
  %415 = vst [vmem:[%s5 + $0x18] sm:$0xff] %v187
  %416 = vst [vmem:[%s6 + $0x8] sm:$0xff] %v258
  %417 = vst [vmem:[%s6 + $0x18] sm:$0xff] %v264
  %418 = vst [vmem:[%s7] sm:$0xff] %v333
  %419 = vst [vmem:[%s7 + $0x8] sm:$0xff] %v335
  %420 = vst [vmem:[%s7 + $0x10] sm:$0xff] %v339
  %421 = vst [vmem:[%s7 + $0x18] sm:$0xff] %v341
  // Predicated region
  $region22: #{attention_forward.3} parent=0 // pred_check
    _
  $region23: #{attention_forward.3} parent=0 // pred_check_branch
    %423 = sbr.rel (0) target = $region25
  $region24: #{attention_forward.3} parent=0 // pred_region
    _
  $region25: #{attention_forward.3} parent=0 // pred_fallthru
    _
  // Predicated region
  $region26: #{attention_forward.3} parent=0 // pred_check
    _
  $region27: #{attention_forward.3} parent=0 // pred_check_branch
    %425 = sbr.rel (0) target = $region29
  $region28: #{attention_forward.3} parent=0 // pred_region
    _
  $region29: #{attention_forward.3} parent=0 // pred_fallthru
    _
  // Predicated region
  $region30: #{attention_forward.3} parent=0 // pred_check
    _
  $region31: #{attention_forward.3} parent=0 // pred_check_branch
    %427 = sbr.rel (0) target = $region33
  $region32: #{attention_forward.3} parent=0 // pred_region
    _
  $region33: #{attention_forward.3} parent=0 // pred_fallthru
    _
  // Predicated region
  $region34: #{attention_forward.3} parent=0 // pred_check
    _
  $region35: #{attention_forward.3} parent=0 // pred_check_branch
    %429 = sbr.rel (0) target = $region37
  $region36: #{attention_forward.3} parent=0 // pred_region
    _
  $region37: #{attention_forward.3} parent=0 // pred_fallthru
    _
  // Predicated region
  $region38: #{attention_forward.3} parent=0 // pred_check
    _
  $region39: #{attention_forward.3} parent=0 // pred_check_branch
    %431 = sbr.rel (0) target = $region41
  $region40: #{attention_forward.3} parent=0 // pred_region
    _
  $region41: #{attention_forward.3} parent=0 // pred_fallthru
    _
  // Predicated region
  $region42: #{attention_forward.3} parent=0 // pred_check
    _
  $region43: #{attention_forward.3} parent=0 // pred_check_branch
    %433 = sbr.rel (0) target = $region45
  $region44: #{attention_forward.3} parent=0 // pred_region
    _
  $region45: #{attention_forward.3} parent=0 // pred_fallthru
    _

// kernel: attention_forward.4
$region0: #{attention_forward.4}
  #allocation0 [shape = 'u32[]', space=smem, size = 0x4, offset = 0x4, fixed_abs, tag = 'smem constant byte address 0x4 - core index']
  #allocation1 [shape = 'u32[144,128]{1,0:T(1,128)}', space=vmem, size = 0x12000, scoped, tag = 'internal scratch']
  #allocation2 [shape = 'f32[4,8,1]{2,1,0:T(8,128)}', space=vmem, size = 0x4000, scoped, tag = 'scratch operand']
  #allocation3 [shape = 'f32[4,8,1]{2,1,0:T(8,128)}', space=vmem, size = 0x4000, scoped, tag = 'scratch operand']
  #allocation4 [shape = 'f32[4,8,64]{2,1,0:T(8,128)}', space=vmem, size = 0x4000, scoped, tag = 'scratch operand']
  #allocation5 [shape = 's32[1]{0}', space=sflag, size = 0x4, scoped, tag = 'scoped memory for attention_forward.4']
  #allocation6 [shape = 'u8[512]{0}', space=smem, size = 0x200, scoped, tag = 'prefetched SMEM operand 0']
  %s0 = inlined_call_operand.vmem [shape: s32[2], index: 0, kind: input, shape index: {}]
  %s1 = inlined_call_operand.vmem [shape: f32[2,8,256], index: 1, kind: input, shape index: {}]
  %s2 = inlined_call_operand.vmem [shape: f32[2,8,256], index: 2, kind: input, shape index: {}]
  %s3 = inlined_call_operand.vmem [shape: f32[2,8,256], index: 3, kind: input, shape index: {}]
  %s4 = inlined_call_operand.vmem [shape: f32[2,8,256], index: 4, kind: output, shape index: {}]
  %s5 = sld [smem:[#allocation0]]
  $region57: #{attention_forward.4} parent=0
    _
  %s7 = ssub.s32 1, %s5
  %s8 = scalar_select 0, %s7, %s5
  %s9 = sshll.u32 %s0, 4
  %s10 = int_to_ptr.vmem [resolvable:$true] %s9
  %12 = dma.vmem_to_smem %s10, 16, [#allocation6], [#allocation5]
  %13 = dma.done [#allocation5], 16
  %14 = sfence
  loop: start=0, step=1, limit=4
  $region2: #{attention_forward.4} parent=0 // loop_pre_header
    _
  $region3: #{attention_forward.4} parent=0 // loop_header
    %s16 = sphi 0, %s20
    %p17 = scmp.ge.s32.totalorder %s16, 4
    %s23 = sphi 0, %s42
    %s24 = sphi 0, %s38
    %s25 = sphi 0, %s34
    %s26 = sphi 0, %s23
    %s27 = sphi 0, %s24
    %s28 = sphi 0, %s25
    %s29 = sphi 0, %s26
    %s30 = sphi 0, %s27
    %s31 = sphi 0, %s28
    %s47 = sphi 0, %s49
    %s50 = sphi 0, %s47
    %s51 = sphi 0, %s50
    %s67 = sphi 0, %s51
    %s75 = sphi 0, %s77
    %s78 = sphi 0, %s75
    %s79 = sphi 0, %s78
    %s95 = sphi 0, %s79
    %s103 = sphi 0, %s105
    %s106 = sphi 0, %s103
    %s107 = sphi 0, %s106
    %s123 = sphi 0, %s107
    %s131 = sphi 0, %s133
    %s134 = sphi 0, %s131
    %s135 = sphi 0, %s134
    %s151 = sphi 0, %s135
  $region4: #{attention_forward.4} parent=0 // loop_header_branch
    %19 = sbr.rel (%p17) target = $region8
  $region5: #{attention_forward.4} parent=0 // loop_body
    %s21 = ssub.s32 %s16, 1
    %s22 = ssub.s32 %s16, 2
    %s32 = sadd.s32 1, %s25
    %p33 = scmp.ge.s32.totalorder %s32, 1
    %s34 = scalar_select %p33, 0, %s32
    %s35 = sadd.s32 1, %s24
    %s36 = scalar_select %p33, %s35, %s24
    %p37 = scmp.ge.s32.totalorder %s36, 1
    %s38 = scalar_select %p37, 0, %s36
    %s39 = sadd.s32 1, %s23
    %s40 = scalar_select %p37, %s39, %s23
    %p41 = scmp.ge.s32.totalorder %s40, 2
    %s42 = scalar_select %p41, 0, %s40
    %s43 = ssub.s32 %s23, %s42
    %s44 = ssub.s32 %s24, %s38
    %s45 = sor.u32 %s43, %s44
    %p46 = scmp.eq.s32.totalorder %s45, 0
    %s48 = sadd.s32 %s47, 1
    %s49 = scalar_select %p46, %s47, %s48
    %p52 = pneg %p46
    %p53 = scmp.eq.s32.totalorder %s16, 1
    %p54 = por %p52, %p53
    %p55 = scmp.ne.s32.totalorder %s47, %s50
    %p56 = scmp.eq.s32.totalorder %s16, 0
    %p57 = por %p55, %p56
    %p58 = scmp.ne.s32.totalorder %s47, %s50
    %p59 = scmp.eq.s32.totalorder %s21, 1
    %p60 = por %p58, %p59
    %p61 = scmp.ne.s32.totalorder %s50, %s51
    %p62 = scmp.eq.s32.totalorder %s21, 0
    %p63 = por %p61, %p62
    %p64 = scmp.ne.s32.totalorder %s50, %s51
    %p65 = scmp.eq.s32.totalorder %s22, 1
    %p66 = por %p64, %p65
    %p68 = scmp.ne.s32.totalorder %s51, %s67
    %p69 = scmp.eq.s32.totalorder %s22, 0
    %p70 = por %p68, %p69
    %s71 = ssub.s32 %s23, %s42
    %s72 = ssub.s32 %s25, %s34
    %s73 = sor.u32 %s71, %s72
    %p74 = scmp.eq.s32.totalorder %s73, 0
    %s76 = sadd.s32 %s75, 1
    %s77 = scalar_select %p74, %s75, %s76
    %p80 = pneg %p74
    %p81 = scmp.eq.s32.totalorder %s16, 1
    %p82 = por %p80, %p81
    %p83 = scmp.ne.s32.totalorder %s75, %s78
    %p84 = scmp.eq.s32.totalorder %s16, 0
    %p85 = por %p83, %p84
    %p86 = scmp.ne.s32.totalorder %s75, %s78
    %p87 = scmp.eq.s32.totalorder %s21, 1
    %p88 = por %p86, %p87
    %p89 = scmp.ne.s32.totalorder %s78, %s79
    %p90 = scmp.eq.s32.totalorder %s21, 0
    %p91 = por %p89, %p90
    %p92 = scmp.ne.s32.totalorder %s78, %s79
    %p93 = scmp.eq.s32.totalorder %s22, 1
    %p94 = por %p92, %p93
    %p96 = scmp.ne.s32.totalorder %s79, %s95
    %p97 = scmp.eq.s32.totalorder %s22, 0
    %p98 = por %p96, %p97
    %s99 = ssub.s32 %s23, %s42
    %s100 = ssub.s32 %s25, %s34
    %s101 = sor.u32 %s99, %s100
    %p102 = scmp.eq.s32.totalorder %s101, 0
    %s104 = sadd.s32 %s103, 1
    %s105 = scalar_select %p102, %s103, %s104
    %p108 = pneg %p102
    %p109 = scmp.eq.s32.totalorder %s16, 1
    %p110 = por %p108, %p109
    %p111 = scmp.ne.s32.totalorder %s103, %s106
    %p112 = scmp.eq.s32.totalorder %s16, 0
    %p113 = por %p111, %p112
    %p114 = scmp.ne.s32.totalorder %s103, %s106
    %p115 = scmp.eq.s32.totalorder %s21, 1
    %p116 = por %p114, %p115
    %p117 = scmp.ne.s32.totalorder %s106, %s107
    %p118 = scmp.eq.s32.totalorder %s21, 0
    %p119 = por %p117, %p118
    %p120 = scmp.ne.s32.totalorder %s106, %s107
    %p121 = scmp.eq.s32.totalorder %s22, 1
    %p122 = por %p120, %p121
    %p124 = scmp.ne.s32.totalorder %s107, %s123
    %p125 = scmp.eq.s32.totalorder %s22, 0
    %p126 = por %p124, %p125
    %s127 = ssub.s32 %s23, %s42
    %s128 = ssub.s32 %s24, %s38
    %s129 = sor.u32 %s127, %s128
    %p130 = scmp.eq.s32.totalorder %s129, 0
    %s132 = sadd.s32 %s131, 1
    %s133 = scalar_select %p130, %s131, %s132
    %p136 = pneg %p130
    %p137 = scmp.eq.s32.totalorder %s16, 1
    %p138 = por %p136, %p137
    %p139 = scmp.ne.s32.totalorder %s131, %s134
    %p140 = scmp.eq.s32.totalorder %s16, 0
    %p141 = por %p139, %p140
    %p142 = scmp.ne.s32.totalorder %s131, %s134
    %p143 = scmp.eq.s32.totalorder %s21, 1
    %p144 = por %p142, %p143
    %p145 = scmp.ne.s32.totalorder %s134, %s135
    %p146 = scmp.eq.s32.totalorder %s21, 0
    %p147 = por %p145, %p146
    %p148 = scmp.ne.s32.totalorder %s134, %s135
    %p149 = scmp.eq.s32.totalorder %s22, 1
    %p150 = por %p148, %p149
    %p152 = scmp.ne.s32.totalorder %s135, %s151
    %p153 = scmp.eq.s32.totalorder %s22, 0
    %p154 = por %p152, %p153
    %p155 = scmp.le.s32.totalorder 1, %s16
    %p156 = scmp.lt.s32.totalorder %s16, 3
    %p157 = pnand %p155, %p156
    %p158 = pneg %p157
    // Predicated region
    $region9: #{attention_forward.4} parent=5 // pred_check
      _
    $region10: #{attention_forward.4} parent=5 // pred_check_branch
      %160 = sbr.rel (%p157) target = $region12
    $region11: #{attention_forward.4} parent=5 // pred_region
      %s161 = ssub.s32 %s16, 1
    $region12: #{attention_forward.4} parent=5 // pred_fallthru
      _
    %p162 = scmp.lt.s32.totalorder %s16, 2
    // Predicated region
    $region13: #{attention_forward.4} parent=5 // pred_check
      %p163 = pneg %p162
    $region14: #{attention_forward.4} parent=5 // pred_check_branch
      %165 = sbr.rel (%p163) target = $region16
    $region15: #{attention_forward.4} parent=5 // pred_region
      // Predicated region
      $region17: #{attention_forward.4} parent=15 // pred_check
        %p166 = pneg %p57
      $region18: #{attention_forward.4} parent=15 // pred_check_branch
        %168 = sbr.rel (%p166) target = $region20
      $region19: #{attention_forward.4} parent=15 // pred_region
        %p169 = scmp.lt.s32.totalorder %s23, 1
        %s170 = scalar_select %p169, %s23, 1
        %p171 = scmp.lt.s32.totalorder %s24, 0
        %s172 = scalar_select %p171, %s24, 0
        %s173 = smul.addr %s172, 2
        %s174 = smul.addr %s170, 2
        %s175 = sadd.s32 %s173, %s174
        %s176 = smul.addr %s175, 8
        %s177 = scalar_lea.vmem %s1, %s176
      $region20: #{attention_forward.4} parent=15 // pred_fallthru
        _
      // Predicated region
      $region21: #{attention_forward.4} parent=15 // pred_check
        %p178 = pneg %p85
      $region22: #{attention_forward.4} parent=15 // pred_check_branch
        %180 = sbr.rel (%p178) target = $region24
      $region23: #{attention_forward.4} parent=15 // pred_region
        %p181 = scmp.lt.s32.totalorder %s23, 1
        %s182 = scalar_select %p181, %s23, 1
        %p183 = scmp.lt.s32.totalorder %s25, 0
        %s184 = scalar_select %p183, %s25, 0
        %s185 = smul.addr %s184, 2
        %s186 = smul.addr %s182, 2
        %s187 = sadd.s32 %s185, %s186
        %s188 = smul.addr %s187, 8
        %s189 = scalar_lea.vmem %s2, %s188
      $region24: #{attention_forward.4} parent=15 // pred_fallthru
        _
      // Predicated region
      $region25: #{attention_forward.4} parent=15 // pred_check
        %p190 = pneg %p113
      $region26: #{attention_forward.4} parent=15 // pred_check_branch
        %192 = sbr.rel (%p190) target = $region28
      $region27: #{attention_forward.4} parent=15 // pred_region
        %p193 = scmp.lt.s32.totalorder %s23, 1
        %s194 = scalar_select %p193, %s23, 1
        %p195 = scmp.lt.s32.totalorder %s25, 0
        %s196 = scalar_select %p195, %s25, 0
        %s197 = smul.addr %s196, 2
        %s198 = smul.addr %s194, 2
        %s199 = sadd.s32 %s197, %s198
        %s200 = smul.addr %s199, 8
        %s201 = scalar_lea.vmem %s3, %s200
      $region28: #{attention_forward.4} parent=15 // pred_fallthru
        _
    $region16: #{attention_forward.4} parent=5 // pred_fallthru
      _
    %p202 = scmp.le.s32.totalorder 1, %s16
    %p203 = scmp.lt.s32.totalorder %s16, 3
    %p204 = pnand %p202, %p203
    %p205 = pneg %p204
    // Predicated region
    $region29: #{attention_forward.4} parent=5 // pred_check
      _
    $region30: #{attention_forward.4} parent=5 // pred_check_branch
      %207 = sbr.rel (%p204) target = $region32
    $region31: #{attention_forward.4} parent=5 // pred_region
      %s208 = ssub.s32 %s16, 1
      %p209 = scmp.lt.s32.totalorder %s26, 1
      %s210 = scalar_select %p209, %s26, 1
      %p211 = scmp.lt.s32.totalorder %s27, 0
      %s212 = scalar_select %p211, %s27, 0
      %s213 = smul.addr %s212, 2
      %s214 = smul.addr %s210, 2
      %s215 = sadd.s32 %s213, %s214
      %s216 = smul.addr %s215, 8
      %s217 = scalar_lea.vmem %s1, %s216
      %p218 = pneg %p63
      %p219 = pneg %p60
      %p220 = scmp.lt.s32.totalorder %s26, 1
      %s221 = scalar_select %p220, %s26, 1
      %p222 = scmp.lt.s32.totalorder %s28, 0
      %s223 = scalar_select %p222, %s28, 0
      %s224 = smul.addr %s223, 2
      %s225 = smul.addr %s221, 2
      %s226 = sadd.s32 %s224, %s225
      %s227 = smul.addr %s226, 8
      %s228 = scalar_lea.vmem %s2, %s227
      %p229 = pneg %p91
      %p230 = pneg %p88
      %p231 = scmp.lt.s32.totalorder %s26, 1
      %s232 = scalar_select %p231, %s26, 1
      %p233 = scmp.lt.s32.totalorder %s28, 0
      %s234 = scalar_select %p233, %s28, 0
      %s235 = smul.addr %s234, 2
      %s236 = smul.addr %s232, 2
      %s237 = sadd.s32 %s235, %s236
      %s238 = smul.addr %s237, 8
      %s239 = scalar_lea.vmem %s3, %s238
      %p240 = pneg %p119
      %p241 = pneg %p116
      %p242 = pneg %p147
      %p243 = pneg %p144
      %p244 = scmp.lt.s32.totalorder %s26, 1
      %s245 = scalar_select %p244, %s26, 1
      %p246 = scmp.lt.s32.totalorder %s27, 0
      %s247 = scalar_select %p246, %s27, 0
      %s248 = smul.addr %s247, 2
      %s249 = smul.addr %s245, 2
      %s250 = sadd.s32 %s248, %s249
      %s251 = smul.addr %s250, 8
      %s252 = scalar_lea.vmem %s4, %s251
      %p253 = scmp.lt.s32.totalorder %s26, 1
      %s254 = scalar_select %p253, %s26, 1
      %p255 = scmp.lt.s32.totalorder %s27, 0
      %s256 = scalar_select %p255, %s27, 0
      %s257 = smul.addr %s256, 2
      %s258 = smul.addr %s254, 2
      %s259 = sadd.s32 %s257, %s258
      %s260 = smul.addr %s259, 8
      %s261 = scalar_lea.vmem %s1, %s260
      %p262 = scmp.lt.s32.totalorder %s26, 1
      %s263 = scalar_select %p262, %s26, 1
      %p264 = scmp.lt.s32.totalorder %s28, 0
      %s265 = scalar_select %p264, %s28, 0
      %s266 = smul.addr %s265, 2
      %s267 = smul.addr %s263, 2
      %s268 = sadd.s32 %s266, %s267
      %s269 = smul.addr %s268, 8
      %s270 = scalar_lea.vmem %s2, %s269
      %p271 = scmp.lt.s32.totalorder %s26, 1
      %s272 = scalar_select %p271, %s26, 1
      %p273 = scmp.lt.s32.totalorder %s28, 0
      %s274 = scalar_select %p273, %s28, 0
      %s275 = smul.addr %s274, 2
      %s276 = smul.addr %s272, 2
      %s277 = sadd.s32 %s275, %s276
      %s278 = smul.addr %s277, 8
      %s279 = scalar_lea.vmem %s3, %s278
      %p280 = scmp.lt.s32.totalorder %s26, 1
      %s281 = scalar_select %p280, %s26, 1
      %p282 = scmp.lt.s32.totalorder %s27, 0
      %s283 = scalar_select %p282, %s27, 0
      %s284 = smul.addr %s283, 2
      %s285 = smul.addr %s281, 2
      %s286 = sadd.s32 %s284, %s285
      %s287 = smul.addr %s286, 8
      %s288 = scalar_lea.vmem %s4, %s287
      %s289 = sld [smem:[#allocation6 + %s26]]
      %p290 = scmp.eq.s32.totalorder %s28, 0
      // Predicated region
      $region33: #{attention_forward.4} parent=31 // pred_check
        %p291 = pneg %p290
      $region34: #{attention_forward.4} parent=31 // pred_check_branch
        %293 = sbr.rel (%p291) target = $region36
      $region35: #{attention_forward.4} parent=31 // pred_region
        %vm294 = vcmask 7168
        %295 = vst.msk [vmem:[#allocation2] sm:$0xff] %vm294, -inf
        %296 = vst.msk [vmem:[#allocation2 + $0x8] sm:$0xff] %vm294, -inf
        %297 = vst.msk [vmem:[#allocation2 + $0x10] sm:$0xff] %vm294, -inf
        %298 = vst.msk [vmem:[#allocation2 + $0x18] sm:$0xff] %vm294, -inf
        %299 = vst.msk [vmem:[#allocation3] sm:$0xff] %vm294, 0.0
        %300 = vst.msk [vmem:[#allocation3 + $0x8] sm:$0xff] %vm294, 0.0
        %301 = vst.msk [vmem:[#allocation3 + $0x10] sm:$0xff] %vm294, 0.0
        %302 = vst.msk [vmem:[#allocation3 + $0x18] sm:$0xff] %vm294, 0.0
        %vm303 = vcmask 523264
        %304 = vst.msk [vmem:[#allocation4] sm:$0xff] %vm303, 0.0
        %305 = vst.msk [vmem:[#allocation4 + $0x8] sm:$0xff] %vm303, 0.0
        %306 = vst.msk [vmem:[#allocation4 + $0x10] sm:$0xff] %vm303, 0.0
        %307 = vst.msk [vmem:[#allocation4 + $0x18] sm:$0xff] %vm303, 0.0
      $region36: #{attention_forward.4} parent=31 // pred_fallthru
        _
      %s308 = smul.u32 %s28, 8
      %p309 = scmp.lt.s32.totalorder %s308, %s289
      // Predicated region
      $region37: #{attention_forward.4} parent=31 // pred_check
        %p310 = pneg %p309
      $region38: #{attention_forward.4} parent=31 // pred_check_branch
        %312 = sbr.rel (%p310) target = $region40
      $region39: #{attention_forward.4} parent=31 // pred_region
        %v313 = vld [vmem:[%s261] sm:$0xff]
        %v314 = vld [vmem:[%s261 + $0x8] sm:$0xff]
        %v315 = vmul.f32 %v313, 0.125
        %v316 = vmul.f32 %v314, 0.125
        %v317 = vld [vmem:[%s270] sm:$0xff]
        %v318 = vld [vmem:[%s270 + $0x8] sm:$0xff]
        %v319 = vld [vmem:[%s279] sm:$0xff]
        %v320 = vld [vmem:[%s279 + $0x8] sm:$0xff]
        %v321 = vlaneseq
        %v322 = vand.u32 %v321, 127
        %v323 = vstv %s308
        %v324 = vadd.s32 %v323, %v322
        %v325 = vstv %s289
        %vm326 = vcmp.lt.s32.totalorder %v324, %v325
        %v327 = vlaneseq
        %v328 = vshrl.u32 %v327, 7
        %v329 = vadd.s32 %v323, %v328
        %vm330 = vcmp.lt.s32.totalorder %v329, %v325
        %v331 = vsel %vm330, 1, 0
        %vm332 = vcmp.eq.s32.totalorder %v331, 1
        %v333 = vsel %vm332, %v319, 0.0
        %v334 = vsel %vm332, %v320, 0.0
        %vm335 = vcmask 523264
        %v337 = vsel %vm335, %v315, 0
        %v340 = vsel %vm335, %v317, 0
        %342 = vmatprep.subr.mxu0 0.0
        %343 = vmatpush1.xpose.msra.mxu0 0.0
        %344 = vmatprep.subr.mxu0 0.0
        %345 = vmatpush1.xpose.msra.mxu0 0.0
        %346 = vmatprep.subr.mxu0 0.0
        %347 = vmatpush1.xpose.msra.mxu0 0.0
        %348 = vmatprep.subr.mxu0 0.0
        %349 = vmatpush1.xpose.msra.mxu0 0.0
        %350 = vmatprep.subr.mxu0 0.0
        %351 = vmatpush1.xpose.msra.mxu0 0.0
        %352 = vmatprep.subr.mxu0 0.0
        %353 = vmatpush1.xpose.msra.mxu0 0.0
        %354 = vmatprep.subr.mxu0 0.0
        %355 = vmatpush1.xpose.msra.mxu0 0.0
        %356 = vmatprep.subr.mxu0 0.0
        %357 = vmatpush1.xpose.msra.mxu0 0.0
        %358 = vmatprep.subr.mxu0 0.0
        %359 = vmatpush1.xpose.msra.mxu0 0.0
        %360 = vmatprep.subr.mxu0 0.0
        %361 = vmatpush1.xpose.msra.mxu0 0.0
        %362 = vmatprep.subr.mxu0 0.0
        %363 = vmatpush1.xpose.msra.mxu0 0.0
        %364 = vmatprep.subr.mxu0 0.0
        %365 = vmatpush1.xpose.msra.mxu0 0.0
        %366 = vmatprep.subr.mxu0 0.0
        %367 = vmatpush1.xpose.msra.mxu0 0.0
        %368 = vmatprep.subr.mxu0 0.0
        %369 = vmatpush1.xpose.msra.mxu0 0.0
        %370 = vmatprep.subr.mxu0 0.0
        %371 = vmatpush1.xpose.msra.mxu0 0.0
        %372 = vmatprep.subr.mxu0 0.0
        %373 = vmatpush1.xpose.msra.mxu0 %v340
        %374 = vmatprep.subr.mxu0 0.0
        %375 = vmatpush2.xpose.msra.mxu0 0.0
        %376 = vmatprep.subr.mxu0 0.0
        %377 = vmatpush2.xpose.msra.mxu0 0.0
        %378 = vmatprep.subr.mxu0 0.0
        %379 = vmatpush2.xpose.msra.mxu0 0.0
        %380 = vmatprep.subr.mxu0 0.0
        %381 = vmatpush2.xpose.msra.mxu0 0.0
        %382 = vmatprep.subr.mxu0 0.0
        %383 = vmatpush2.xpose.msra.mxu0 0.0
        %384 = vmatprep.subr.mxu0 0.0
        %385 = vmatpush2.xpose.msra.mxu0 0.0
        %386 = vmatprep.subr.mxu0 0.0
        %387 = vmatpush2.xpose.msra.mxu0 0.0
        %388 = vmatprep.subr.mxu0 0.0
        %389 = vmatpush2.xpose.msra.mxu0 0.0
        %390 = vmatprep.subr.mxu0 0.0
        %391 = vmatpush2.xpose.msra.mxu0 0.0
        %392 = vmatprep.subr.mxu0 0.0
        %393 = vmatpush2.xpose.msra.mxu0 0.0
        %394 = vmatprep.subr.mxu0 0.0
        %395 = vmatpush2.xpose.msra.mxu0 0.0
        %396 = vmatprep.subr.mxu0 0.0
        %397 = vmatpush2.xpose.msra.mxu0 0.0
        %398 = vmatprep.subr.mxu0 0.0
        %399 = vmatpush2.xpose.msra.mxu0 0.0
        %400 = vmatprep.subr.mxu0 0.0
        %401 = vmatpush2.xpose.msra.mxu0 0.0
        %402 = vmatprep.subr.mxu0 0.0
        %403 = vmatpush2.xpose.msra.mxu0 0.0
        %404 = vmatprep.subr.mxu0 0.0
        %405 = vmatpush2.xpose.msra.mxu0 0.0
        %406 = vmatprep.mubr.f32.mxu0 0.0
        %407 = vmatmul.mubr.f32.gmra.mxu0 %v337
        %v408 = vpop.f32.mrf.mxu0
        %v409 = vadd.f32 0.0, %v408
        %v410 = vpop.f32.mrf.mxu0
        %411 = vdwg.mxu0
        %v412 = vsel %vm326, %v409, -1e+30
        %v413 = vld [vmem:[#allocation2] sm:$0xff]
        %vm414 = vcmask 64512
        %v415 = vsel %vm414, %v412, -inf
        %416 = vmax.xlane.f32.xlu0 %v415
        %v417 = vpop.xlane.xlu0 %416
        %v418 = vmax.f32 %v413, %v417
        %v419 = vsub.f32 %v413, %v418
        %v420 = vmul.f32 %v419, 1.442695
        %v421 = vpow.pop %v420
        %423 = vset.pattern.permute.xlu0 0
        %424 = vperm.xlu0 %423, %v418
        %v425 = vpop.permute.xlu0 %424
        %v427 = vsub.f32 %v412, %v425
        %v428 = vmul.f32 %v427, 1.442695
        %v429 = vpow.pop %v428
        %v430 = vld [vmem:[#allocation3] sm:$0xff]
        %v431 = vmul.f32 %v421, %v430
        %v432 = vsel %vm414, %v429, 0.0
        %433 = vadd.xlane.f32.xlu0 %v432
        %v434 = vpop.xlane.xlu0 %433
        %v435 = vadd.f32 %v431, %v434
        %vm436 = vcmask 7168
        %437 = vst.msk [vmem:[#allocation3] sm:$0xff] %vm436, %v435
        %v438 = vld [vmem:[#allocation4] sm:$0xff]
        %440 = vset.pattern.permute.xlu0 0
        %441 = vperm.xlu0 %440, %v421
        %v442 = vpop.permute.xlu0 %441
        %v444 = vmul.f32 %v442, %v438
        %v446 = vsel %vm414, %v429, 0
        %448 = vmatprep.subr.mxu0 0.0
        %449 = vmatpush1.msra.mxu0 0.0
        %450 = vmatprep.subr.mxu0 0.0
        %451 = vmatpush1.msra.mxu0 0.0
        %452 = vmatprep.subr.mxu0 0.0
        %453 = vmatpush1.msra.mxu0 0.0
        %454 = vmatprep.subr.mxu0 0.0
        %455 = vmatpush1.msra.mxu0 0.0
        %456 = vmatprep.subr.mxu0 0.0
        %457 = vmatpush1.msra.mxu0 0.0
        %458 = vmatprep.subr.mxu0 0.0
        %459 = vmatpush1.msra.mxu0 0.0
        %460 = vmatprep.subr.mxu0 0.0
        %461 = vmatpush1.msra.mxu0 0.0
        %462 = vmatprep.subr.mxu0 0.0
        %463 = vmatpush1.msra.mxu0 0.0
        %464 = vmatprep.subr.mxu0 0.0
        %465 = vmatpush1.msra.mxu0 0.0
        %466 = vmatprep.subr.mxu0 0.0
        %467 = vmatpush1.msra.mxu0 0.0
        %468 = vmatprep.subr.mxu0 0.0
        %469 = vmatpush1.msra.mxu0 0.0
        %470 = vmatprep.subr.mxu0 0.0
        %471 = vmatpush1.msra.mxu0 0.0
        %472 = vmatprep.subr.mxu0 0.0
        %473 = vmatpush1.msra.mxu0 0.0
        %474 = vmatprep.subr.mxu0 0.0
        %475 = vmatpush1.msra.mxu0 0.0
        %476 = vmatprep.subr.mxu0 0.0
        %477 = vmatpush1.msra.mxu0 0.0
        %478 = vmatprep.subr.mxu0 0.0
        %479 = vmatpush1.msra.mxu0 %v333
        %480 = vmatprep.subr.mxu0 0.0
        %481 = vmatpush2.msra.mxu0 0.0
        %482 = vmatprep.subr.mxu0 0.0
        %483 = vmatpush2.msra.mxu0 0.0
        %484 = vmatprep.subr.mxu0 0.0
        %485 = vmatpush2.msra.mxu0 0.0
        %486 = vmatprep.subr.mxu0 0.0
        %487 = vmatpush2.msra.mxu0 0.0
        %488 = vmatprep.subr.mxu0 0.0
        %489 = vmatpush2.msra.mxu0 0.0
        %490 = vmatprep.subr.mxu0 0.0
        %491 = vmatpush2.msra.mxu0 0.0
        %492 = vmatprep.subr.mxu0 0.0
        %493 = vmatpush2.msra.mxu0 0.0
        %494 = vmatprep.subr.mxu0 0.0
        %495 = vmatpush2.msra.mxu0 0.0
        %496 = vmatprep.subr.mxu0 0.0
        %497 = vmatpush2.msra.mxu0 0.0
        %498 = vmatprep.subr.mxu0 0.0
        %499 = vmatpush2.msra.mxu0 0.0
        %500 = vmatprep.subr.mxu0 0.0
        %501 = vmatpush2.msra.mxu0 0.0
        %502 = vmatprep.subr.mxu0 0.0
        %503 = vmatpush2.msra.mxu0 0.0
        %504 = vmatprep.subr.mxu0 0.0
        %505 = vmatpush2.msra.mxu0 0.0
        %506 = vmatprep.subr.mxu0 0.0
        %507 = vmatpush2.msra.mxu0 0.0
        %508 = vmatprep.subr.mxu0 0.0
        %509 = vmatpush2.msra.mxu0 0.0
        %510 = vmatprep.subr.mxu0 0.0
        %511 = vmatpush2.msra.mxu0 0.0
        %512 = vmatprep.mubr.f32.mxu0 0.0
        %513 = vmatmul.mubr.f32.gmra.mxu0 %v446
        %v514 = vpop.f32.mrf.mxu0
        %v515 = vadd.f32 0.0, %v514
        %v516 = vpop.f32.mrf.mxu0
        %517 = vdwg.mxu0
        %v518 = vadd.f32 %v444, %v515
        %519 = vst.msk [vmem:[#allocation4] sm:$0xff] %vm335, %v518
        %520 = vst.msk [vmem:[#allocation2] sm:$0xff] %vm436, %v418
        %521 = vrot.lane.b32.xlu0 %v315, 64
        %v522 = vpop.permute.xlu0 %521
        %523 = vrot.lane.b32.xlu0 %v317, 64
        %v524 = vpop.permute.xlu0 %523
        %v525 = vsel %vm335, %v522, 0
        %v527 = vsel %vm335, %v524, 0
        %529 = vmatprep.subr.mxu0 0.0
        %530 = vmatpush1.xpose.msra.mxu0 0.0
        %531 = vmatprep.subr.mxu0 0.0
        %532 = vmatpush1.xpose.msra.mxu0 0.0
        %533 = vmatprep.subr.mxu0 0.0
        %534 = vmatpush1.xpose.msra.mxu0 0.0
        %535 = vmatprep.subr.mxu0 0.0
        %536 = vmatpush1.xpose.msra.mxu0 0.0
        %537 = vmatprep.subr.mxu0 0.0
        %538 = vmatpush1.xpose.msra.mxu0 0.0
        %539 = vmatprep.subr.mxu0 0.0
        %540 = vmatpush1.xpose.msra.mxu0 0.0
        %541 = vmatprep.subr.mxu0 0.0
        %542 = vmatpush1.xpose.msra.mxu0 0.0
        %543 = vmatprep.subr.mxu0 0.0
        %544 = vmatpush1.xpose.msra.mxu0 0.0
        %545 = vmatprep.subr.mxu0 0.0
        %546 = vmatpush1.xpose.msra.mxu0 0.0
        %547 = vmatprep.subr.mxu0 0.0
        %548 = vmatpush1.xpose.msra.mxu0 0.0
        %549 = vmatprep.subr.mxu0 0.0
        %550 = vmatpush1.xpose.msra.mxu0 0.0
        %551 = vmatprep.subr.mxu0 0.0
        %552 = vmatpush1.xpose.msra.mxu0 0.0
        %553 = vmatprep.subr.mxu0 0.0
        %554 = vmatpush1.xpose.msra.mxu0 0.0
        %555 = vmatprep.subr.mxu0 0.0
        %556 = vmatpush1.xpose.msra.mxu0 0.0
        %557 = vmatprep.subr.mxu0 0.0
        %558 = vmatpush1.xpose.msra.mxu0 0.0
        %559 = vmatprep.subr.mxu0 0.0
        %560 = vmatpush1.xpose.msra.mxu0 %v527
        %561 = vmatprep.subr.mxu0 0.0
        %562 = vmatpush2.xpose.msra.mxu0 0.0
        %563 = vmatprep.subr.mxu0 0.0
        %564 = vmatpush2.xpose.msra.mxu0 0.0
        %565 = vmatprep.subr.mxu0 0.0
        %566 = vmatpush2.xpose.msra.mxu0 0.0
        %567 = vmatprep.subr.mxu0 0.0
        %568 = vmatpush2.xpose.msra.mxu0 0.0
        %569 = vmatprep.subr.mxu0 0.0
        %570 = vmatpush2.xpose.msra.mxu0 0.0
        %571 = vmatprep.subr.mxu0 0.0
        %572 = vmatpush2.xpose.msra.mxu0 0.0
        %573 = vmatprep.subr.mxu0 0.0
        %574 = vmatpush2.xpose.msra.mxu0 0.0
        %575 = vmatprep.subr.mxu0 0.0
        %576 = vmatpush2.xpose.msra.mxu0 0.0
        %577 = vmatprep.subr.mxu0 0.0
        %578 = vmatpush2.xpose.msra.mxu0 0.0
        %579 = vmatprep.subr.mxu0 0.0
        %580 = vmatpush2.xpose.msra.mxu0 0.0
        %581 = vmatprep.subr.mxu0 0.0
        %582 = vmatpush2.xpose.msra.mxu0 0.0
        %583 = vmatprep.subr.mxu0 0.0
        %584 = vmatpush2.xpose.msra.mxu0 0.0
        %585 = vmatprep.subr.mxu0 0.0
        %586 = vmatpush2.xpose.msra.mxu0 0.0
        %587 = vmatprep.subr.mxu0 0.0
        %588 = vmatpush2.xpose.msra.mxu0 0.0
        %589 = vmatprep.subr.mxu0 0.0
        %590 = vmatpush2.xpose.msra.mxu0 0.0
        %591 = vmatprep.subr.mxu0 0.0
        %592 = vmatpush2.xpose.msra.mxu0 0.0
        %593 = vmatprep.mubr.f32.mxu0 0.0
        %594 = vmatmul.mubr.f32.gmra.mxu0 %v525
        %v595 = vpop.f32.mrf.mxu0
        %v596 = vadd.f32 0.0, %v595
        %v597 = vpop.f32.mrf.mxu0
        %598 = vdwg.mxu0
        %v599 = vsel %vm326, %v596, -1e+30
        %s600 = scalar_lea.vmem [#allocation2], 8
        %v601 = vld [vmem:[%s600] sm:$0xff]
        %v602 = vsel %vm414, %v599, -inf
        %603 = vmax.xlane.f32.xlu0 %v602
        %v604 = vpop.xlane.xlu0 %603
        %v605 = vmax.f32 %v601, %v604
        %v606 = vsub.f32 %v601, %v605
        %v607 = vmul.f32 %v606, 1.442695
        %v608 = vpow.pop %v607
        %610 = vset.pattern.permute.xlu0 0
        %611 = vperm.xlu0 %610, %v605
        %v612 = vpop.permute.xlu0 %611
        %v614 = vsub.f32 %v599, %v612
        %v615 = vmul.f32 %v614, 1.442695
        %v616 = vpow.pop %v615
        %s617 = scalar_lea.vmem [#allocation3], 8
        %v618 = vld [vmem:[%s617] sm:$0xff]
        %v619 = vmul.f32 %v608, %v618
        %v620 = vsel %vm414, %v616, 0.0
        %621 = vadd.xlane.f32.xlu0 %v620
        %v622 = vpop.xlane.xlu0 %621
        %v623 = vadd.f32 %v619, %v622
        %624 = vst.msk [vmem:[%s617] sm:$0xff] %vm436, %v623
        %s625 = scalar_lea.vmem [#allocation4], 8
        %v626 = vld [vmem:[%s625] sm:$0xff]
        %628 = vset.pattern.permute.xlu0 0
        %629 = vperm.xlu0 %628, %v608
        %v630 = vpop.permute.xlu0 %629
        %v632 = vmul.f32 %v630, %v626
        %634 = vrot.lane.b32.xlu0 %v333, 64
        %v635 = vpop.permute.xlu0 %634
        %v638 = vsel %vm414, %v616, 0
        %640 = vmatprep.subr.mxu0 0.0
        %641 = vmatpush1.msra.mxu0 0.0
        %642 = vmatprep.subr.mxu0 0.0
        %643 = vmatpush1.msra.mxu0 0.0
        %644 = vmatprep.subr.mxu0 0.0
        %645 = vmatpush1.msra.mxu0 0.0
        %646 = vmatprep.subr.mxu0 0.0
        %647 = vmatpush1.msra.mxu0 0.0
        %648 = vmatprep.subr.mxu0 0.0
        %649 = vmatpush1.msra.mxu0 0.0
        %650 = vmatprep.subr.mxu0 0.0
        %651 = vmatpush1.msra.mxu0 0.0
        %652 = vmatprep.subr.mxu0 0.0
        %653 = vmatpush1.msra.mxu0 0.0
        %654 = vmatprep.subr.mxu0 0.0
        %655 = vmatpush1.msra.mxu0 0.0
        %656 = vmatprep.subr.mxu0 0.0
        %657 = vmatpush1.msra.mxu0 0.0
        %658 = vmatprep.subr.mxu0 0.0
        %659 = vmatpush1.msra.mxu0 0.0
        %660 = vmatprep.subr.mxu0 0.0
        %661 = vmatpush1.msra.mxu0 0.0
        %662 = vmatprep.subr.mxu0 0.0
        %663 = vmatpush1.msra.mxu0 0.0
        %664 = vmatprep.subr.mxu0 0.0
        %665 = vmatpush1.msra.mxu0 0.0
        %666 = vmatprep.subr.mxu0 0.0
        %667 = vmatpush1.msra.mxu0 0.0
        %668 = vmatprep.subr.mxu0 0.0
        %669 = vmatpush1.msra.mxu0 0.0
        %670 = vmatprep.subr.mxu0 0.0
        %671 = vmatpush1.msra.mxu0 %v635
        %672 = vmatprep.subr.mxu0 0.0
        %673 = vmatpush2.msra.mxu0 0.0
        %674 = vmatprep.subr.mxu0 0.0
        %675 = vmatpush2.msra.mxu0 0.0
        %676 = vmatprep.subr.mxu0 0.0
        %677 = vmatpush2.msra.mxu0 0.0
        %678 = vmatprep.subr.mxu0 0.0
        %679 = vmatpush2.msra.mxu0 0.0
        %680 = vmatprep.subr.mxu0 0.0
        %681 = vmatpush2.msra.mxu0 0.0
        %682 = vmatprep.subr.mxu0 0.0
        %683 = vmatpush2.msra.mxu0 0.0
        %684 = vmatprep.subr.mxu0 0.0
        %685 = vmatpush2.msra.mxu0 0.0
        %686 = vmatprep.subr.mxu0 0.0
        %687 = vmatpush2.msra.mxu0 0.0
        %688 = vmatprep.subr.mxu0 0.0
        %689 = vmatpush2.msra.mxu0 0.0
        %690 = vmatprep.subr.mxu0 0.0
        %691 = vmatpush2.msra.mxu0 0.0
        %692 = vmatprep.subr.mxu0 0.0
        %693 = vmatpush2.msra.mxu0 0.0
        %694 = vmatprep.subr.mxu0 0.0
        %695 = vmatpush2.msra.mxu0 0.0
        %696 = vmatprep.subr.mxu0 0.0
        %697 = vmatpush2.msra.mxu0 0.0
        %698 = vmatprep.subr.mxu0 0.0
        %699 = vmatpush2.msra.mxu0 0.0
        %700 = vmatprep.subr.mxu0 0.0
        %701 = vmatpush2.msra.mxu0 0.0
        %702 = vmatprep.subr.mxu0 0.0
        %703 = vmatpush2.msra.mxu0 0.0
        %704 = vmatprep.mubr.f32.mxu0 0.0
        %705 = vmatmul.mubr.f32.gmra.mxu0 %v638
        %v706 = vpop.f32.mrf.mxu0
        %v707 = vadd.f32 0.0, %v706
        %v708 = vpop.f32.mrf.mxu0
        %709 = vdwg.mxu0
        %v710 = vadd.f32 %v632, %v707
        %711 = vst.msk [vmem:[%s625] sm:$0xff] %vm335, %v710
        %712 = vst.msk [vmem:[%s600] sm:$0xff] %vm436, %v605
        %v714 = vsel %vm335, %v316, 0
        %v717 = vsel %vm335, %v318, 0
        %719 = vmatprep.subr.mxu0 0.0
        %720 = vmatpush1.xpose.msra.mxu0 0.0
        %721 = vmatprep.subr.mxu0 0.0
        %722 = vmatpush1.xpose.msra.mxu0 0.0
        %723 = vmatprep.subr.mxu0 0.0
        %724 = vmatpush1.xpose.msra.mxu0 0.0
        %725 = vmatprep.subr.mxu0 0.0
        %726 = vmatpush1.xpose.msra.mxu0 0.0
        %727 = vmatprep.subr.mxu0 0.0
        %728 = vmatpush1.xpose.msra.mxu0 0.0
        %729 = vmatprep.subr.mxu0 0.0
        %730 = vmatpush1.xpose.msra.mxu0 0.0
        %731 = vmatprep.subr.mxu0 0.0
        %732 = vmatpush1.xpose.msra.mxu0 0.0
        %733 = vmatprep.subr.mxu0 0.0
        %734 = vmatpush1.xpose.msra.mxu0 0.0
        %735 = vmatprep.subr.mxu0 0.0
        %736 = vmatpush1.xpose.msra.mxu0 0.0
        %737 = vmatprep.subr.mxu0 0.0
        %738 = vmatpush1.xpose.msra.mxu0 0.0
        %739 = vmatprep.subr.mxu0 0.0
        %740 = vmatpush1.xpose.msra.mxu0 0.0
        %741 = vmatprep.subr.mxu0 0.0
        %742 = vmatpush1.xpose.msra.mxu0 0.0
        %743 = vmatprep.subr.mxu0 0.0
        %744 = vmatpush1.xpose.msra.mxu0 0.0
        %745 = vmatprep.subr.mxu0 0.0
        %746 = vmatpush1.xpose.msra.mxu0 0.0
        %747 = vmatprep.subr.mxu0 0.0
        %748 = vmatpush1.xpose.msra.mxu0 0.0
        %749 = vmatprep.subr.mxu0 0.0
        %750 = vmatpush1.xpose.msra.mxu0 %v717
        %751 = vmatprep.subr.mxu0 0.0
        %752 = vmatpush2.xpose.msra.mxu0 0.0
        %753 = vmatprep.subr.mxu0 0.0
        %754 = vmatpush2.xpose.msra.mxu0 0.0
        %755 = vmatprep.subr.mxu0 0.0
        %756 = vmatpush2.xpose.msra.mxu0 0.0
        %757 = vmatprep.subr.mxu0 0.0
        %758 = vmatpush2.xpose.msra.mxu0 0.0
        %759 = vmatprep.subr.mxu0 0.0
        %760 = vmatpush2.xpose.msra.mxu0 0.0
        %761 = vmatprep.subr.mxu0 0.0
        %762 = vmatpush2.xpose.msra.mxu0 0.0
        %763 = vmatprep.subr.mxu0 0.0
        %764 = vmatpush2.xpose.msra.mxu0 0.0
        %765 = vmatprep.subr.mxu0 0.0
        %766 = vmatpush2.xpose.msra.mxu0 0.0
        %767 = vmatprep.subr.mxu0 0.0
        %768 = vmatpush2.xpose.msra.mxu0 0.0
        %769 = vmatprep.subr.mxu0 0.0
        %770 = vmatpush2.xpose.msra.mxu0 0.0
        %771 = vmatprep.subr.mxu0 0.0
        %772 = vmatpush2.xpose.msra.mxu0 0.0
        %773 = vmatprep.subr.mxu0 0.0
        %774 = vmatpush2.xpose.msra.mxu0 0.0
        %775 = vmatprep.subr.mxu0 0.0
        %776 = vmatpush2.xpose.msra.mxu0 0.0
        %777 = vmatprep.subr.mxu0 0.0
        %778 = vmatpush2.xpose.msra.mxu0 0.0
        %779 = vmatprep.subr.mxu0 0.0
        %780 = vmatpush2.xpose.msra.mxu0 0.0
        %781 = vmatprep.subr.mxu0 0.0
        %782 = vmatpush2.xpose.msra.mxu0 0.0
        %783 = vmatprep.mubr.f32.mxu0 0.0
        %784 = vmatmul.mubr.f32.gmra.mxu0 %v714
        %v785 = vpop.f32.mrf.mxu0
        %v786 = vadd.f32 0.0, %v785
        %v787 = vpop.f32.mrf.mxu0
        %788 = vdwg.mxu0
        %v789 = vsel %vm326, %v786, -1e+30
        %s790 = scalar_lea.vmem [#allocation2], 16
        %v791 = vld [vmem:[%s790] sm:$0xff]
        %v792 = vsel %vm414, %v789, -inf
        %793 = vmax.xlane.f32.xlu0 %v792
        %v794 = vpop.xlane.xlu0 %793
        %v795 = vmax.f32 %v791, %v794
        %v796 = vsub.f32 %v791, %v795
        %v797 = vmul.f32 %v796, 1.442695
        %v798 = vpow.pop %v797
        %800 = vset.pattern.permute.xlu0 0
        %801 = vperm.xlu0 %800, %v795
        %v802 = vpop.permute.xlu0 %801
        %v804 = vsub.f32 %v789, %v802
        %v805 = vmul.f32 %v804, 1.442695
        %v806 = vpow.pop %v805
        %s807 = scalar_lea.vmem [#allocation3], 16
        %v808 = vld [vmem:[%s807] sm:$0xff]
        %v809 = vmul.f32 %v798, %v808
        %v810 = vsel %vm414, %v806, 0.0
        %811 = vadd.xlane.f32.xlu0 %v810
        %v812 = vpop.xlane.xlu0 %811
        %v813 = vadd.f32 %v809, %v812
        %814 = vst.msk [vmem:[%s807] sm:$0xff] %vm436, %v813
        %s815 = scalar_lea.vmem [#allocation4], 16
        %v816 = vld [vmem:[%s815] sm:$0xff]
        %818 = vset.pattern.permute.xlu0 0
        %819 = vperm.xlu0 %818, %v798
        %v820 = vpop.permute.xlu0 %819
        %v822 = vmul.f32 %v820, %v816
        %v824 = vsel %vm414, %v806, 0
        %826 = vmatprep.subr.mxu0 0.0
        %827 = vmatpush1.msra.mxu0 0.0
        %828 = vmatprep.subr.mxu0 0.0
        %829 = vmatpush1.msra.mxu0 0.0
        %830 = vmatprep.subr.mxu0 0.0
        %831 = vmatpush1.msra.mxu0 0.0
        %832 = vmatprep.subr.mxu0 0.0
        %833 = vmatpush1.msra.mxu0 0.0
        %834 = vmatprep.subr.mxu0 0.0
        %835 = vmatpush1.msra.mxu0 0.0
        %836 = vmatprep.subr.mxu0 0.0
        %837 = vmatpush1.msra.mxu0 0.0
        %838 = vmatprep.subr.mxu0 0.0
        %839 = vmatpush1.msra.mxu0 0.0
        %840 = vmatprep.subr.mxu0 0.0
        %841 = vmatpush1.msra.mxu0 0.0
        %842 = vmatprep.subr.mxu0 0.0
        %843 = vmatpush1.msra.mxu0 0.0
        %844 = vmatprep.subr.mxu0 0.0
        %845 = vmatpush1.msra.mxu0 0.0
        %846 = vmatprep.subr.mxu0 0.0
        %847 = vmatpush1.msra.mxu0 0.0
        %848 = vmatprep.subr.mxu0 0.0
        %849 = vmatpush1.msra.mxu0 0.0
        %850 = vmatprep.subr.mxu0 0.0
        %851 = vmatpush1.msra.mxu0 0.0
        %852 = vmatprep.subr.mxu0 0.0
        %853 = vmatpush1.msra.mxu0 0.0
        %854 = vmatprep.subr.mxu0 0.0
        %855 = vmatpush1.msra.mxu0 0.0
        %856 = vmatprep.subr.mxu0 0.0
        %857 = vmatpush1.msra.mxu0 %v334
        %858 = vmatprep.subr.mxu0 0.0
        %859 = vmatpush2.msra.mxu0 0.0
        %860 = vmatprep.subr.mxu0 0.0
        %861 = vmatpush2.msra.mxu0 0.0
        %862 = vmatprep.subr.mxu0 0.0
        %863 = vmatpush2.msra.mxu0 0.0
        %864 = vmatprep.subr.mxu0 0.0
        %865 = vmatpush2.msra.mxu0 0.0
        %866 = vmatprep.subr.mxu0 0.0
        %867 = vmatpush2.msra.mxu0 0.0
        %868 = vmatprep.subr.mxu0 0.0
        %869 = vmatpush2.msra.mxu0 0.0
        %870 = vmatprep.subr.mxu0 0.0
        %871 = vmatpush2.msra.mxu0 0.0
        %872 = vmatprep.subr.mxu0 0.0
        %873 = vmatpush2.msra.mxu0 0.0
        %874 = vmatprep.subr.mxu0 0.0
        %875 = vmatpush2.msra.mxu0 0.0
        %876 = vmatprep.subr.mxu0 0.0
        %877 = vmatpush2.msra.mxu0 0.0
        %878 = vmatprep.subr.mxu0 0.0
        %879 = vmatpush2.msra.mxu0 0.0
        %880 = vmatprep.subr.mxu0 0.0
        %881 = vmatpush2.msra.mxu0 0.0
        %882 = vmatprep.subr.mxu0 0.0
        %883 = vmatpush2.msra.mxu0 0.0
        %884 = vmatprep.subr.mxu0 0.0
        %885 = vmatpush2.msra.mxu0 0.0
        %886 = vmatprep.subr.mxu0 0.0
        %887 = vmatpush2.msra.mxu0 0.0
        %888 = vmatprep.subr.mxu0 0.0
        %889 = vmatpush2.msra.mxu0 0.0
        %890 = vmatprep.mubr.f32.mxu0 0.0
        %891 = vmatmul.mubr.f32.gmra.mxu0 %v824
        %v892 = vpop.f32.mrf.mxu0
        %v893 = vadd.f32 0.0, %v892
        %v894 = vpop.f32.mrf.mxu0
        %895 = vdwg.mxu0
        %v896 = vadd.f32 %v822, %v893
        %897 = vst.msk [vmem:[%s815] sm:$0xff] %vm335, %v896
        %898 = vst.msk [vmem:[%s790] sm:$0xff] %vm436, %v795
        %899 = vrot.lane.b32.xlu0 %v316, 64
        %v900 = vpop.permute.xlu0 %899
        %901 = vrot.lane.b32.xlu0 %v318, 64
        %v902 = vpop.permute.xlu0 %901
        %v903 = vsel %vm335, %v900, 0
        %v905 = vsel %vm335, %v902, 0
        %907 = vmatprep.subr.mxu0 0.0
        %908 = vmatpush1.xpose.msra.mxu0 0.0
        %909 = vmatprep.subr.mxu0 0.0
        %910 = vmatpush1.xpose.msra.mxu0 0.0
        %911 = vmatprep.subr.mxu0 0.0
        %912 = vmatpush1.xpose.msra.mxu0 0.0
        %913 = vmatprep.subr.mxu0 0.0
        %914 = vmatpush1.xpose.msra.mxu0 0.0
        %915 = vmatprep.subr.mxu0 0.0
        %916 = vmatpush1.xpose.msra.mxu0 0.0
        %917 = vmatprep.subr.mxu0 0.0
        %918 = vmatpush1.xpose.msra.mxu0 0.0
        %919 = vmatprep.subr.mxu0 0.0
        %920 = vmatpush1.xpose.msra.mxu0 0.0
        %921 = vmatprep.subr.mxu0 0.0
        %922 = vmatpush1.xpose.msra.mxu0 0.0
        %923 = vmatprep.subr.mxu0 0.0
        %924 = vmatpush1.xpose.msra.mxu0 0.0
        %925 = vmatprep.subr.mxu0 0.0
        %926 = vmatpush1.xpose.msra.mxu0 0.0
        %927 = vmatprep.subr.mxu0 0.0
        %928 = vmatpush1.xpose.msra.mxu0 0.0
        %929 = vmatprep.subr.mxu0 0.0
        %930 = vmatpush1.xpose.msra.mxu0 0.0
        %931 = vmatprep.subr.mxu0 0.0
        %932 = vmatpush1.xpose.msra.mxu0 0.0
        %933 = vmatprep.subr.mxu0 0.0
        %934 = vmatpush1.xpose.msra.mxu0 0.0
        %935 = vmatprep.subr.mxu0 0.0
        %936 = vmatpush1.xpose.msra.mxu0 0.0
        %937 = vmatprep.subr.mxu0 0.0
        %938 = vmatpush1.xpose.msra.mxu0 %v905
        %939 = vmatprep.subr.mxu0 0.0
        %940 = vmatpush2.xpose.msra.mxu0 0.0
        %941 = vmatprep.subr.mxu0 0.0
        %942 = vmatpush2.xpose.msra.mxu0 0.0
        %943 = vmatprep.subr.mxu0 0.0
        %944 = vmatpush2.xpose.msra.mxu0 0.0
        %945 = vmatprep.subr.mxu0 0.0
        %946 = vmatpush2.xpose.msra.mxu0 0.0
        %947 = vmatprep.subr.mxu0 0.0
        %948 = vmatpush2.xpose.msra.mxu0 0.0
        %949 = vmatprep.subr.mxu0 0.0
        %950 = vmatpush2.xpose.msra.mxu0 0.0
        %951 = vmatprep.subr.mxu0 0.0
        %952 = vmatpush2.xpose.msra.mxu0 0.0
        %953 = vmatprep.subr.mxu0 0.0
        %954 = vmatpush2.xpose.msra.mxu0 0.0
        %955 = vmatprep.subr.mxu0 0.0
        %956 = vmatpush2.xpose.msra.mxu0 0.0
        %957 = vmatprep.subr.mxu0 0.0
        %958 = vmatpush2.xpose.msra.mxu0 0.0
        %959 = vmatprep.subr.mxu0 0.0
        %960 = vmatpush2.xpose.msra.mxu0 0.0
        %961 = vmatprep.subr.mxu0 0.0
        %962 = vmatpush2.xpose.msra.mxu0 0.0
        %963 = vmatprep.subr.mxu0 0.0
        %964 = vmatpush2.xpose.msra.mxu0 0.0
        %965 = vmatprep.subr.mxu0 0.0
        %966 = vmatpush2.xpose.msra.mxu0 0.0
        %967 = vmatprep.subr.mxu0 0.0
        %968 = vmatpush2.xpose.msra.mxu0 0.0
        %969 = vmatprep.subr.mxu0 0.0
        %970 = vmatpush2.xpose.msra.mxu0 0.0
        %971 = vmatprep.mubr.f32.mxu0 0.0
        %972 = vmatmul.mubr.f32.gmra.mxu0 %v903
        %v973 = vpop.f32.mrf.mxu0
        %v974 = vadd.f32 0.0, %v973
        %v975 = vpop.f32.mrf.mxu0
        %976 = vdwg.mxu0
        %v977 = vsel %vm326, %v974, -1e+30
        %s978 = scalar_lea.vmem [#allocation2], 24
        %v979 = vld [vmem:[%s978] sm:$0xff]
        %v980 = vsel %vm414, %v977, -inf
        %981 = vmax.xlane.f32.xlu0 %v980
        %v982 = vpop.xlane.xlu0 %981
        %v983 = vmax.f32 %v979, %v982
        %v984 = vsub.f32 %v979, %v983
        %v985 = vmul.f32 %v984, 1.442695
        %v986 = vpow.pop %v985
        %988 = vset.pattern.permute.xlu0 0
        %989 = vperm.xlu0 %988, %v983
        %v990 = vpop.permute.xlu0 %989
        %v992 = vsub.f32 %v977, %v990
        %v993 = vmul.f32 %v992, 1.442695
        %v994 = vpow.pop %v993
        %s995 = scalar_lea.vmem [#allocation3], 24
        %v996 = vld [vmem:[%s995] sm:$0xff]
        %v997 = vmul.f32 %v986, %v996
        %v998 = vsel %vm414, %v994, 0.0
        %999 = vadd.xlane.f32.xlu0 %v998
        %v1000 = vpop.xlane.xlu0 %999
        %v1001 = vadd.f32 %v997, %v1000
        %1002 = vst.msk [vmem:[%s995] sm:$0xff] %vm436, %v1001
        %s1003 = scalar_lea.vmem [#allocation4], 24
        %v1004 = vld [vmem:[%s1003] sm:$0xff]
        %1006 = vset.pattern.permute.xlu0 0
        %1007 = vperm.xlu0 %1006, %v986
        %v1008 = vpop.permute.xlu0 %1007
        %v1010 = vmul.f32 %v1008, %v1004
        %1012 = vrot.lane.b32.xlu0 %v334, 64
        %v1013 = vpop.permute.xlu0 %1012
        %v1016 = vsel %vm414, %v994, 0
        %1018 = vmatprep.subr.mxu0 0.0
        %1019 = vmatpush1.msra.mxu0 0.0
        %1020 = vmatprep.subr.mxu0 0.0
        %1021 = vmatpush1.msra.mxu0 0.0
        %1022 = vmatprep.subr.mxu0 0.0
        %1023 = vmatpush1.msra.mxu0 0.0
        %1024 = vmatprep.subr.mxu0 0.0
        %1025 = vmatpush1.msra.mxu0 0.0
        %1026 = vmatprep.subr.mxu0 0.0
        %1027 = vmatpush1.msra.mxu0 0.0
        %1028 = vmatprep.subr.mxu0 0.0
        %1029 = vmatpush1.msra.mxu0 0.0
        %1030 = vmatprep.subr.mxu0 0.0
        %1031 = vmatpush1.msra.mxu0 0.0
        %1032 = vmatprep.subr.mxu0 0.0
        %1033 = vmatpush1.msra.mxu0 0.0
        %1034 = vmatprep.subr.mxu0 0.0
        %1035 = vmatpush1.msra.mxu0 0.0
        %1036 = vmatprep.subr.mxu0 0.0
        %1037 = vmatpush1.msra.mxu0 0.0
        %1038 = vmatprep.subr.mxu0 0.0
        %1039 = vmatpush1.msra.mxu0 0.0
        %1040 = vmatprep.subr.mxu0 0.0
        %1041 = vmatpush1.msra.mxu0 0.0
        %1042 = vmatprep.subr.mxu0 0.0
        %1043 = vmatpush1.msra.mxu0 0.0
        %1044 = vmatprep.subr.mxu0 0.0
        %1045 = vmatpush1.msra.mxu0 0.0
        %1046 = vmatprep.subr.mxu0 0.0
        %1047 = vmatpush1.msra.mxu0 0.0
        %1048 = vmatprep.subr.mxu0 0.0
        %1049 = vmatpush1.msra.mxu0 %v1013
        %1050 = vmatprep.subr.mxu0 0.0
        %1051 = vmatpush2.msra.mxu0 0.0
        %1052 = vmatprep.subr.mxu0 0.0
        %1053 = vmatpush2.msra.mxu0 0.0
        %1054 = vmatprep.subr.mxu0 0.0
        %1055 = vmatpush2.msra.mxu0 0.0
        %1056 = vmatprep.subr.mxu0 0.0
        %1057 = vmatpush2.msra.mxu0 0.0
        %1058 = vmatprep.subr.mxu0 0.0
        %1059 = vmatpush2.msra.mxu0 0.0
        %1060 = vmatprep.subr.mxu0 0.0
        %1061 = vmatpush2.msra.mxu0 0.0
        %1062 = vmatprep.subr.mxu0 0.0
        %1063 = vmatpush2.msra.mxu0 0.0
        %1064 = vmatprep.subr.mxu0 0.0
        %1065 = vmatpush2.msra.mxu0 0.0
        %1066 = vmatprep.subr.mxu0 0.0
        %1067 = vmatpush2.msra.mxu0 0.0
        %1068 = vmatprep.subr.mxu0 0.0
        %1069 = vmatpush2.msra.mxu0 0.0
        %1070 = vmatprep.subr.mxu0 0.0
        %1071 = vmatpush2.msra.mxu0 0.0
        %1072 = vmatprep.subr.mxu0 0.0
        %1073 = vmatpush2.msra.mxu0 0.0
        %1074 = vmatprep.subr.mxu0 0.0
        %1075 = vmatpush2.msra.mxu0 0.0
        %1076 = vmatprep.subr.mxu0 0.0
        %1077 = vmatpush2.msra.mxu0 0.0
        %1078 = vmatprep.subr.mxu0 0.0
        %1079 = vmatpush2.msra.mxu0 0.0
        %1080 = vmatprep.subr.mxu0 0.0
        %1081 = vmatpush2.msra.mxu0 0.0
        %1082 = vmatprep.mubr.f32.mxu0 0.0
        %1083 = vmatmul.mubr.f32.gmra.mxu0 %v1016
        %v1084 = vpop.f32.mrf.mxu0
        %v1085 = vadd.f32 0.0, %v1084
        %v1086 = vpop.f32.mrf.mxu0
        %1087 = vdwg.mxu0
        %v1088 = vadd.f32 %v1010, %v1085
        %1089 = vst.msk [vmem:[%s1003] sm:$0xff] %vm335, %v1088
        %1090 = vst.msk [vmem:[%s978] sm:$0xff] %vm436, %v983
      $region40: #{attention_forward.4} parent=31 // pred_fallthru
        _
      // Predicated region
      $region41: #{attention_forward.4} parent=31 // pred_check
        %p1091 = pneg %p290
      $region42: #{attention_forward.4} parent=31 // pred_check_branch
        %1093 = sbr.rel (%p1091) target = $region44
      $region43: #{attention_forward.4} parent=31 // pred_region
        %v1094 = vld [vmem:[#allocation3] sm:$0xff]
        %vm1095 = vcmp.gt.f32.partialorder %v1094, 0.0
        %v1096 = vsel %vm1095, %v1094, 1.0
        %v1097 = vld [vmem:[#allocation4] sm:$0xff]
        %v1098 = vrcp.pop %v1096
        %1100 = vset.pattern.permute.xlu0 0
        %1101 = vperm.xlu0 %1100, %v1098
        %v1102 = vpop.permute.xlu0 %1101
        %v1104 = vmul.f32 %v1097, %v1102
        %s1105 = scalar_lea.vmem [#allocation3], 8
        %v1106 = vld [vmem:[%s1105] sm:$0xff]
        %vm1107 = vcmp.gt.f32.partialorder %v1106, 0.0
        %v1108 = vsel %vm1107, %v1106, 1.0
        %s1109 = scalar_lea.vmem [#allocation4], 8
        %v1110 = vld [vmem:[%s1109] sm:$0xff]
        %v1111 = vrcp.pop %v1108
        %1113 = vset.pattern.permute.xlu0 0
        %1114 = vperm.xlu0 %1113, %v1111
        %v1115 = vpop.permute.xlu0 %1114
        %v1117 = vmul.f32 %v1110, %v1115
        %s1118 = scalar_lea.vmem [#allocation3], 16
        %v1119 = vld [vmem:[%s1118] sm:$0xff]
        %vm1120 = vcmp.gt.f32.partialorder %v1119, 0.0
        %v1121 = vsel %vm1120, %v1119, 1.0
        %s1122 = scalar_lea.vmem [#allocation4], 16
        %v1123 = vld [vmem:[%s1122] sm:$0xff]
        %v1124 = vrcp.pop %v1121
        %1126 = vset.pattern.permute.xlu0 0
        %1127 = vperm.xlu0 %1126, %v1124
        %v1128 = vpop.permute.xlu0 %1127
        %v1130 = vmul.f32 %v1123, %v1128
        %s1131 = scalar_lea.vmem [#allocation3], 24
        %v1132 = vld [vmem:[%s1131] sm:$0xff]
        %vm1133 = vcmp.gt.f32.partialorder %v1132, 0.0
        %v1134 = vsel %vm1133, %v1132, 1.0
        %s1135 = scalar_lea.vmem [#allocation4], 24
        %v1136 = vld [vmem:[%s1135] sm:$0xff]
        %v1137 = vrcp.pop %v1134
        %1139 = vset.pattern.permute.xlu0 0
        %1140 = vperm.xlu0 %1139, %v1137
        %v1141 = vpop.permute.xlu0 %1140
        %v1143 = vmul.f32 %v1136, %v1141
        %1145 = vrot.lane.b32.xlu0 %v1117, 64
        %v1146 = vpop.permute.xlu0 %1145
        %1149 = vrot.lane.b32.xlu0 %v1143, 64
        %v1150 = vpop.permute.xlu0 %1149
        %vm1152 = vcmask 523264
        %v1153 = vsel %vm1152, %v1104, %v1146
        %v1154 = vsel %vm1152, %v1130, %v1150
        %1155 = vst [vmem:[%s288] sm:$0xff] %v1153
        %1156 = vst [vmem:[%s288 + $0x8] sm:$0xff] %v1154
      $region44: #{attention_forward.4} parent=31 // pred_fallthru
        _
      %p1157 = scmp.lt.s32.totalorder %s26, 1
      %s1158 = scalar_select %p1157, %s26, 1
      %p1159 = scmp.lt.s32.totalorder %s27, 0
      %s1160 = scalar_select %p1159, %s27, 0
      %s1161 = smul.addr %s1160, 2
      %s1162 = smul.addr %s1158, 2
      %s1163 = sadd.s32 %s1161, %s1162
      %s1164 = smul.addr %s1163, 8
      %s1165 = scalar_lea.vmem %s4, %s1164
      // Predicated region
      $region45: #{attention_forward.4} parent=31 // pred_check
        %p1166 = pneg %p144
      $region46: #{attention_forward.4} parent=31 // pred_check_branch
        %1168 = sbr.rel (%p1166) target = $region48
      $region47: #{attention_forward.4} parent=31 // pred_region
        _
      $region48: #{attention_forward.4} parent=31 // pred_fallthru
        _
    $region32: #{attention_forward.4} parent=5 // pred_fallthru
      _
    %p1169 = scmp.le.s32.totalorder 2, %s16
    // Predicated region
    $region49: #{attention_forward.4} parent=5 // pred_check
      %p1170 = pneg %p1169
    $region50: #{attention_forward.4} parent=5 // pred_check_branch
      %1172 = sbr.rel (%p1170) target = $region52
    $region51: #{attention_forward.4} parent=5 // pred_region
      %s1173 = ssub.s32 %s16, 2
      // Predicated region
      $region53: #{attention_forward.4} parent=51 // pred_check
        %p1174 = pneg %p150
      $region54: #{attention_forward.4} parent=51 // pred_check_branch
        %1176 = sbr.rel (%p1174) target = $region56
      $region55: #{attention_forward.4} parent=51 // pred_region
        %p1177 = scmp.lt.s32.totalorder %s29, 1
        %s1178 = scalar_select %p1177, %s29, 1
        %p1179 = scmp.lt.s32.totalorder %s30, 0
        %s1180 = scalar_select %p1179, %s30, 0
        %s1181 = smul.addr %s1180, 2
        %s1182 = smul.addr %s1178, 2
        %s1183 = sadd.s32 %s1181, %s1182
        %s1184 = smul.addr %s1183, 8
        %s1185 = scalar_lea.vmem %s4, %s1184
      $region56: #{attention_forward.4} parent=51 // pred_fallthru
        _
    $region52: #{attention_forward.4} parent=5 // pred_fallthru
      _
  $region6: #{attention_forward.4} parent=0 // loop_footer
    %s20 = sadd.s32 1, %s16
  $region7: #{attention_forward.4} parent=0 // loop_footer_branch
    %15 = sbr.rel target = $region3
  $region8: #{attention_forward.4} parent=0 // loop_exit
    _

</llo_original>
